<compile_context>
chip_gen: v7x
topology: tpu7x:2x2x1
jax: 0.10.0
libtpu: 0.0.40
codegen_flags: <defaults>
</compile_context>

<pallas_src>
import numpy as np
import jax
import jax.numpy as jnp
from jax import lax
from jax.experimental import pallas as pl
from jax.experimental.pallas import tpu as pltpu

# ---- small, deterministic hyperparameters (same structure as ConvMixer defaults) ----
IN_CHANNELS = 3
HDIM = 32          # h
DEPTH = 2          # depth
KSIZE = 3          # depthwise kernel size (odd -> symmetric 'same' padding, as PyTorch)
PATCH = 4          # patch_size
N_CLASSES = 10
IMG = 16
BATCH = 2
BN_EPS = 1e-5
LANE_OUT = 128     # lane-dense (zero-padded) width for the head output


def _gelu_exact(x):
    # nn.GELU() default is the exact (erf-based) GELU.
    return 0.5 * x * (1.0 + lax.erf(x * 0.7071067811865476))


# ---------------- constant shift matrices for the depthwise conv ----------------

def build_shift_matrices(H, W, k):
    """Stack of k*k 0/1 matrices, shape (k*k*H*W, H*W).

    For tap t=(dy,dx), S_t @ X gathers the (dy-pad, dx-pad)-shifted, zero-padded copy
    of an (H*W, C) activation — i.e. PyTorch Conv2d(padding='same') cross-correlation
    taps, so the whole 'same' padding lives inside one aligned MXU matmul.
    """
    pad = (k - 1) // 2
    p2 = H * W
    hh, ww = np.meshgrid(np.arange(H), np.arange(W), indexing="ij")
    hh = hh.reshape(-1)
    ww = ww.reshape(-1)
    cols = np.arange(p2)[None, :]
    mats = []
    for dy in range(k):
        for dx in range(k):
            hs = hh + dy - pad
            ws = ww + dx - pad
            valid = (hs >= 0) & (hs < H) & (ws >= 0) & (ws < W)
            q = hs * W + ws
            mats.append(((q[:, None] == cols) & valid[:, None]).astype(np.float32))
    return jnp.asarray(np.concatenate(mats, axis=0))


# ---------------- the single fused Pallas kernel ----------------

def _convmixer_fused_kernel(xp_ref, smat_ref,
                            wpe_ref, bpe_ref, spe_ref, tpe_ref,
                            wdw_ref, bdw_ref, sdw_ref, tdw_ref,
                            wpw_ref, bpw_ref, spw_ref, tpw_ref,
                            wln_ref, bln_ref,
                            o_ref):
    p2 = smat_ref.shape[1]              # number of spatial positions (Hg*Wg)
    kk = smat_ref.shape[0] // p2        # number of depthwise taps (KSIZE**2)
    depth = wdw_ref.shape[0]

    # Patch embedding: (p2, Cin*P*P) @ (Cin*P*P, C) + bias -> GELU -> folded BN.
    x = jnp.dot(xp_ref[0], wpe_ref[...], preferred_element_type=jnp.float32)
    x = spe_ref[...] * _gelu_exact(x + bpe_ref[...]) + tpe_ref[...]          # (p2, C)

    smat = smat_ref[...]                                                     # (kk*p2, p2)

    for l in range(depth):
        # ---- ResidualBlock(depthwise kxk conv + GELU + BN) ----
        # One MXU matmul produces all kk shifted/zero-padded copies of x at once.
        shifted = jnp.dot(smat, x, preferred_element_type=jnp.float32)       # (kk*p2, C)
        wdw = wdw_ref[l]                                                     # (kk, C)
        acc = shifted[0:p2, :] * wdw[0:1, :]
        for t in range(1, kk):                                               # static unroll
            acc = acc + shifted[t * p2:(t + 1) * p2, :] * wdw[t:t + 1, :]
        y = sdw_ref[l] * _gelu_exact(acc + bdw_ref[l]) + tdw_ref[l]
        x = y + x                                                            # fn(x) + x

        # ---- pointwise 1x1 conv + GELU + BN ----
        z = jnp.dot(x, wpw_ref[l], preferred_element_type=jnp.float32)
        x = spw_ref[l] * _gelu_exact(z + bpw_ref[l]) + tpw_ref[l]

    # ---- AdaptiveAvgPool2d((1,1)) + Flatten + Linear head (lane-padded to 128) ----
    # mean and matmul commute, so pool after the matmul to keep M=p2 (no M=1 dot).
    head = jnp.dot(x, wln_ref[...], preferred_element_type=jnp.float32)      # (p2, 128)
    o_ref[0] = jnp.mean(head, axis=0, keepdims=True) + bln_ref[...]          # (1, 128)


def convmixer_forward(x_nchw, params):
    B, Cin, H, W = x_nchw.shape
    Hg, Wg = H // PATCH, W // PATCH
    P2 = Hg * Wg
    CP = Cin * PATCH * PATCH
    KK = KSIZE * KSIZE

    # Patchify NCHW -> (B, Hg*Wg, Cin*P*P); patch vector flattened in (c, i, j) order,
    # matching the Conv2d(stride=patch) weight flattening.
    xp = x_nchw.reshape(B, Cin, Hg, PATCH, Wg, PATCH)
    xp = xp.transpose(0, 2, 4, 1, 3, 5).reshape(B, P2, CP)

    smat = build_shift_matrices(Hg, Wg, KSIZE)            # compile-time constant

    def full_spec(shape):
        return pl.BlockSpec(shape, lambda *_: (0,) * len(shape))

    out = pl.pallas_call(
        _convmixer_fused_kernel,
        out_shape=jax.ShapeDtypeStruct((B, 1, LANE_OUT), jnp.float32),
        grid=(B,),
        in_specs=[
            pl.BlockSpec((1, P2, CP), lambda b: (b, 0, 0)),   # per-batch patches
            full_spec((KK * P2, P2)),                         # shift matrices
            full_spec((CP, HDIM)), full_spec((1, HDIM)),
            full_spec((1, HDIM)), full_spec((1, HDIM)),       # patch embed w/b/scale/shift
            full_spec((DEPTH, KK, HDIM)), full_spec((DEPTH, 1, HDIM)),
            full_spec((DEPTH, 1, HDIM)), full_spec((DEPTH, 1, HDIM)),   # depthwise
            full_spec((DEPTH, HDIM, HDIM)), full_spec((DEPTH, 1, HDIM)),
            full_spec((DEPTH, 1, HDIM)), full_spec((DEPTH, 1, HDIM)),   # pointwise
            full_spec((HDIM, LANE_OUT)), full_spec((1, LANE_OUT)),      # head
        ],
        out_specs=pl.BlockSpec((1, 1, LANE_OUT), lambda b: (b, 0, 0)),
        compiler_params=pltpu.CompilerParams(dimension_semantics=("parallel",)),
    )(xp, smat,
      params["w_pe"], params["b_pe"], params["s_pe"], params["t_pe"],
      params["w_dw"], params["b_dw"], params["s_dw"], params["t_dw"],
      params["w_pw"], params["b_pw"], params["s_pw"], params["t_pw"],
      params["w_ln"], params["b_ln"])
    return out.reshape(B, LANE_OUT)[:, :N_CLASSES]


# ---------------- parameter setup (deterministic, in-script) ----------------

def bn_fold(gamma, beta, mean, var, eps=BN_EPS):
    s = gamma / jnp.sqrt(var + eps)
    t = beta - mean * s
    return s.reshape(1, -1).astype(jnp.float32), t.reshape(1, -1).astype(jnp.float32)


def init_params(key):
    def nrm(k, shape, scale=0.05):
        return scale * jax.random.normal(k, shape, dtype=jnp.float32)

    keys = iter(jax.random.split(key, 64))
    KK = KSIZE * KSIZE
    CP = IN_CHANNELS * PATCH * PATCH

    # Patch embedding: Conv2d(IN, H, PATCH, stride=PATCH) -> weight (H, IN, P, P)
    w_pe = nrm(next(keys), (HDIM, IN_CHANNELS, PATCH, PATCH))
    b_pe = nrm(next(keys), (HDIM,))
    g_pe = 1.0 + nrm(next(keys), (HDIM,))
    be_pe = nrm(next(keys), (HDIM,))
    s_pe, t_pe = bn_fold(g_pe, be_pe, jnp.zeros(HDIM), jnp.ones(HDIM))

    w_dw_l, b_dw_l, s_dw_l, t_dw_l = [], [], [], []
    w_pw_l, b_pw_l, s_pw_l, t_pw_l = [], [], [], []
    for _ in range(DEPTH):
        # Depthwise: Conv2d(H, H, K, groups=H, padding='same') -> weight (H, 1, K, K)
        w_dw = nrm(next(keys), (HDIM, 1, KSIZE, KSIZE))
        b_dw = nrm(next(keys), (HDIM,))
        g_dw = 1.0 + nrm(next(keys), (HDIM,))
        be_dw = nrm(next(keys), (HDIM,))
        s_dw, t_dw = bn_fold(g_dw, be_dw, jnp.zeros(HDIM), jnp.ones(HDIM))
        # Pointwise: Conv2d(H, H, 1) -> weight (H, H, 1, 1)
        w_pw = nrm(next(keys), (HDIM, HDIM, 1, 1))
        b_pw = nrm(next(keys), (HDIM,))
        g_pw = 1.0 + nrm(next(keys), (HDIM,))
        be_pw = nrm(next(keys), (HDIM,))
        s_pw, t_pw = bn_fold(g_pw, be_pw, jnp.zeros(HDIM), jnp.ones(HDIM))

        # taps flattened row-major in (dy, dx) order -> (K*K, H), matching shift matrices
        w_dw_l.append(jnp.transpose(w_dw[:, 0], (1, 2, 0)).reshape(KK, HDIM))
        b_dw_l.append(b_dw.reshape(1, HDIM)); s_dw_l.append(s_dw); t_dw_l.append(t_dw)
        w_pw_l.append(w_pw[:, :, 0, 0].T)                       # (H_in, H_out)
        b_pw_l.append(b_pw.reshape(1, HDIM)); s_pw_l.append(s_pw); t_pw_l.append(t_pw)

    # Linear head: nn.Linear(H, N_CLASSES) -> weight (N_CLASSES, H); zero-padded to a
    # lane-dense 128-wide output (sliced back to N_CLASSES in the wrapper).
    w_ln = nrm(next(keys), (N_CLASSES, HDIM))
    b_ln = nrm(next(keys), (N_CLASSES,))
    w_ln_pad = jnp.zeros((HDIM, LANE_OUT), jnp.float32).at[:, :N_CLASSES].set(w_ln.T)
    b_ln_pad = jnp.zeros((1, LANE_OUT), jnp.float32).at[:, :N_CLASSES].set(b_ln.reshape(1, -1))

    return dict(
        w_pe=w_pe.reshape(HDIM, CP).T,          # (Cin*P*P, H), (c,i,j)-order flattening
        b_pe=b_pe.reshape(1, HDIM), s_pe=s_pe, t_pe=t_pe,
        w_dw=jnp.stack(w_dw_l), b_dw=jnp.stack(b_dw_l),
        s_dw=jnp.stack(s_dw_l), t_dw=jnp.stack(t_dw_l),
        w_pw=jnp.stack(w_pw_l), b_pw=jnp.stack(b_pw_l),
        s_pw=jnp.stack(s_pw_l), t_pw=jnp.stack(t_pw_l),
        w_ln=w_ln_pad, b_ln=b_ln_pad)


# ---------------- pure-JAX reference (same math, pad-and-slice formulation) ----------------

def reference_forward(x_nchw, p):
    hi = jax.lax.Precision.HIGHEST
    B, Cin, H, W = x_nchw.shape
    Hg, Wg = H // PATCH, W // PATCH
    xp = x_nchw.reshape(B, Cin, Hg, PATCH, Wg, PATCH).transpose(0, 2, 4, 1, 3, 5)
    xp = xp.reshape(B, Hg * Wg, Cin * PATCH * PATCH)
    y = jnp.einsum("bpk,kc->bpc", xp, p["w_pe"], precision=hi) + p["b_pe"]
    act = (p["s_pe"] * _gelu_exact(y) + p["t_pe"]).reshape(B, Hg, Wg, HDIM)
    pad = (KSIZE - 1) // 2
    for l in range(DEPTH):
        xpd = jnp.pad(act, ((0, 0), (pad, KSIZE - 1 - pad), (pad, KSIZE - 1 - pad), (0, 0)))
        wdw = p["w_dw"][l].reshape(KSIZE, KSIZE, HDIM)
        acc = jnp.zeros_like(act)
        for dy in range(KSIZE):
            for dx in range(KSIZE):
                acc = acc + xpd[:, dy:dy + Hg, dx:dx + Wg, :] * wdw[dy, dx]
        y = p["s_dw"][l] * _gelu_exact(acc + p["b_dw"][l]) + p["t_dw"][l]
        act = y + act
        z = jnp.einsum("bhwc,cd->bhwd", act, p["w_pw"][l], precision=hi) + p["b_pw"][l]
        act = p["s_pw"][l] * _gelu_exact(z) + p["t_pw"][l]
    pooled = act.reshape(B, Hg * Wg, HDIM).mean(axis=1)
    logits = jnp.dot(pooled, p["w_ln"], precision=hi) + p["b_ln"]
    return logits[:, :N_CLASSES]


if __name__ == "__main__":
    key = jax.random.PRNGKey(0)
    k_x, k_p = jax.random.split(key)
    x = jax.random.normal(k_x, (BATCH, IN_CHANNELS, IMG, IMG), dtype=jnp.float32)
    params = init_params(k_p)

    logits = jax.jit(convmixer_forward)(x, params)
    jax.block_until_ready(logits)
    assert logits.shape == (BATCH, N_CLASSES)
    assert bool(jnp.all(jnp.isfinite(logits)))

    ref = reference_forward(x, params)
    err = float(jnp.max(jnp.abs(logits - ref)))
    assert err < 1e-3, f"kernel vs reference mismatch: max abs err {err}"
    print("KERNEL_OK")
</pallas_src>

<mosaic_0001>
module attributes {stable_mosaic.version = 11 : i64} {
  func.func @_convmixer_fused_kernel(%arg0: i32, %arg1: memref<1x16x48xf32, #tpu.memory_space<vmem>>, %arg2: memref<144x16xf32, #tpu.memory_space<vmem>>, %arg3: memref<48x32xf32, #tpu.memory_space<vmem>>, %arg4: memref<1x32xf32, #tpu.memory_space<vmem>>, %arg5: memref<1x32xf32, #tpu.memory_space<vmem>>, %arg6: memref<1x32xf32, #tpu.memory_space<vmem>>, %arg7: memref<2x9x32xf32, #tpu.memory_space<vmem>>, %arg8: memref<2x1x32xf32, #tpu.memory_space<vmem>>, %arg9: memref<2x1x32xf32, #tpu.memory_space<vmem>>, %arg10: memref<2x1x32xf32, #tpu.memory_space<vmem>>, %arg11: memref<2x32x32xf32, #tpu.memory_space<vmem>>, %arg12: memref<2x1x32xf32, #tpu.memory_space<vmem>>, %arg13: memref<2x1x32xf32, #tpu.memory_space<vmem>>, %arg14: memref<2x1x32xf32, #tpu.memory_space<vmem>>, %arg15: memref<32x128xf32, #tpu.memory_space<vmem>>, %arg16: memref<1x128xf32, #tpu.memory_space<vmem>>, %arg17: memref<1x1x128xf32, #tpu.memory_space<vmem>>) attributes {dimension_semantics = [#tpu.dimension_semantics<parallel>], iteration_bounds = array<i64: 2>, scalar_prefetch = 0 : i64, scratch_operands = 0 : i64, tpu.core_type = #tpu.core_type<tc>, window_params = [{transform_indices = @transform_0, window_bounds = array<i64: 1, 16, 48>}, {pipeline_mode = #tpu.pipeline_mode<synchronous>, transform_indices = @transform_1, window_bounds = array<i64: 144, 16>}, {pipeline_mode = #tpu.pipeline_mode<synchronous>, transform_indices = @transform_2, window_bounds = array<i64: 48, 32>}, {pipeline_mode = #tpu.pipeline_mode<synchronous>, transform_indices = @transform_3, window_bounds = array<i64: 1, 32>}, {pipeline_mode = #tpu.pipeline_mode<synchronous>, transform_indices = @transform_4, window_bounds = array<i64: 1, 32>}, {pipeline_mode = #tpu.pipeline_mode<synchronous>, transform_indices = @transform_5, window_bounds = array<i64: 1, 32>}, {pipeline_mode = #tpu.pipeline_mode<synchronous>, transform_indices = @transform_6, window_bounds = array<i64: 2, 9, 32>}, {pipeline_mode = #tpu.pipeline_mode<synchronous>, transform_indices = @transform_7, window_bounds = array<i64: 2, 1, 32>}, {pipeline_mode = #tpu.pipeline_mode<synchronous>, transform_indices = @transform_8, window_bounds = array<i64: 2, 1, 32>}, {pipeline_mode = #tpu.pipeline_mode<synchronous>, transform_indices = @transform_9, window_bounds = array<i64: 2, 1, 32>}, {pipeline_mode = #tpu.pipeline_mode<synchronous>, transform_indices = @transform_10, window_bounds = array<i64: 2, 32, 32>}, {pipeline_mode = #tpu.pipeline_mode<synchronous>, transform_indices = @transform_11, window_bounds = array<i64: 2, 1, 32>}, {pipeline_mode = #tpu.pipeline_mode<synchronous>, transform_indices = @transform_12, window_bounds = array<i64: 2, 1, 32>}, {pipeline_mode = #tpu.pipeline_mode<synchronous>, transform_indices = @transform_13, window_bounds = array<i64: 2, 1, 32>}, {pipeline_mode = #tpu.pipeline_mode<synchronous>, transform_indices = @transform_14, window_bounds = array<i64: 32, 128>}, {pipeline_mode = #tpu.pipeline_mode<synchronous>, transform_indices = @transform_15, window_bounds = array<i64: 1, 128>}, {transform_indices = @transform_16, window_bounds = array<i64: 1, 1, 128>}]} {
    %c0 = arith.constant 0 : index
    %c0_0 = arith.constant 0 : index
    %c0_1 = arith.constant 0 : index
    %0 = vector.load %arg1[%c0, %c0_0, %c0_1] : memref<1x16x48xf32, #tpu.memory_space<vmem>>, vector<1x16x48xf32>
    %1 = vector.shape_cast %0 : vector<1x16x48xf32> to vector<16x48xf32>
    %c0_2 = arith.constant 0 : index
    %c0_3 = arith.constant 0 : index
    %2 = vector.load %arg3[%c0_2, %c0_3] : memref<48x32xf32, #tpu.memory_space<vmem>>, vector<48x32xf32>
    %cst = arith.constant dense<0.000000e+00> : vector<16x32xf32>
    %3 = tpu.matmul %1, %2, %cst {dimension_numbers = #tpu.dot_dimension_numbers<[1], [0], [0], [1], [0, 0, 1, 1], [], []>} : vector<16x48xf32>, vector<48x32xf32>, vector<16x32xf32> -> vector<16x32xf32>
    %c0_4 = arith.constant 0 : index
    %c0_5 = arith.constant 0 : index
    %4 = vector.load %arg5[%c0_4, %c0_5] : memref<1x32xf32, #tpu.memory_space<vmem>>, vector<1x32xf32>
    %c0_6 = arith.constant 0 : index
    %c0_7 = arith.constant 0 : index
    %5 = vector.load %arg4[%c0_6, %c0_7] : memref<1x32xf32, #tpu.memory_space<vmem>>, vector<1x32xf32>
    %6 = vector.broadcast %5 : vector<1x32xf32> to vector<16x32xf32>
    %7 = arith.addf %3, %6 : vector<16x32xf32>
    %cst_8 = arith.constant 5.000000e-01 : f32
    %8 = vector.broadcast %cst_8 : f32 to vector<16x32xf32>
    %9 = arith.mulf %8, %7 : vector<16x32xf32>
    %cst_9 = arith.constant 0.707106769 : f32
    %10 = vector.broadcast %cst_9 : f32 to vector<16x32xf32>
    %11 = arith.mulf %7, %10 : vector<16x32xf32>
    %12 = math.erf %11 : vector<16x32xf32>
    %cst_10 = arith.constant 1.000000e+00 : f32
    %13 = vector.broadcast %cst_10 : f32 to vector<16x32xf32>
    %14 = arith.addf %13, %12 : vector<16x32xf32>
    %15 = arith.mulf %9, %14 : vector<16x32xf32>
    %16 = vector.broadcast %4 : vector<1x32xf32> to vector<16x32xf32>
    %17 = arith.mulf %16, %15 : vector<16x32xf32>
    %c0_11 = arith.constant 0 : index
    %c0_12 = arith.constant 0 : index
    %18 = vector.load %arg6[%c0_11, %c0_12] : memref<1x32xf32, #tpu.memory_space<vmem>>, vector<1x32xf32>
    %19 = vector.broadcast %18 : vector<1x32xf32> to vector<16x32xf32>
    %20 = arith.addf %17, %19 : vector<16x32xf32>
    %c0_13 = arith.constant 0 : index
    %c0_14 = arith.constant 0 : index
    %21 = vector.load %arg2[%c0_13, %c0_14] : memref<144x16xf32, #tpu.memory_space<vmem>>, vector<144x16xf32>
    %cst_15 = arith.constant dense<0.000000e+00> : vector<144x32xf32>
    %22 = tpu.matmul %21, %20, %cst_15 {dimension_numbers = #tpu.dot_dimension_numbers<[1], [0], [0], [1], [0, 0, 1, 1], [], []>} : vector<144x16xf32>, vector<16x32xf32>, vector<144x32xf32> -> vector<144x32xf32>
    %c0_16 = arith.constant 0 : index
    %c0_17 = arith.constant 0 : index
    %c0_18 = arith.constant 0 : index
    %23 = vector.load %arg7[%c0_16, %c0_17, %c0_18] : memref<2x9x32xf32, #tpu.memory_space<vmem>>, vector<1x9x32xf32>
    %24 = vector.shape_cast %23 : vector<1x9x32xf32> to vector<9x32xf32>
    %25 = vector.extract_strided_slice %22 {offsets = [0, 0], sizes = [16, 32], strides = [1, 1]} : vector<144x32xf32> to vector<16x32xf32>
    %26 = vector.extract_strided_slice %24 {offsets = [0, 0], sizes = [1, 32], strides = [1, 1]} : vector<9x32xf32> to vector<1x32xf32>
    %27 = vector.broadcast %26 : vector<1x32xf32> to vector<16x32xf32>
    %28 = arith.mulf %25, %27 : vector<16x32xf32>
    %29 = vector.extract_strided_slice %22 {offsets = [16, 0], sizes = [16, 32], strides = [1, 1]} : vector<144x32xf32> to vector<16x32xf32>
    %30 = vector.extract_strided_slice %24 {offsets = [1, 0], sizes = [1, 32], strides = [1, 1]} : vector<9x32xf32> to vector<1x32xf32>
    %31 = vector.broadcast %30 : vector<1x32xf32> to vector<16x32xf32>
    %32 = arith.mulf %29, %31 : vector<16x32xf32>
    %33 = arith.addf %28, %32 : vector<16x32xf32>
    %34 = vector.extract_strided_slice %22 {offsets = [32, 0], sizes = [16, 32], strides = [1, 1]} : vector<144x32xf32> to vector<16x32xf32>
    %35 = vector.extract_strided_slice %24 {offsets = [2, 0], sizes = [1, 32], strides = [1, 1]} : vector<9x32xf32> to vector<1x32xf32>
    %36 = vector.broadcast %35 : vector<1x32xf32> to vector<16x32xf32>
    %37 = arith.mulf %34, %36 : vector<16x32xf32>
    %38 = arith.addf %33, %37 : vector<16x32xf32>
    %39 = vector.extract_strided_slice %22 {offsets = [48, 0], sizes = [16, 32], strides = [1, 1]} : vector<144x32xf32> to vector<16x32xf32>
    %40 = vector.extract_strided_slice %24 {offsets = [3, 0], sizes = [1, 32], strides = [1, 1]} : vector<9x32xf32> to vector<1x32xf32>
    %41 = vector.broadcast %40 : vector<1x32xf32> to vector<16x32xf32>
    %42 = arith.mulf %39, %41 : vector<16x32xf32>
    %43 = arith.addf %38, %42 : vector<16x32xf32>
    %44 = vector.extract_strided_slice %22 {offsets = [64, 0], sizes = [16, 32], strides = [1, 1]} : vector<144x32xf32> to vector<16x32xf32>
    %45 = vector.extract_strided_slice %24 {offsets = [4, 0], sizes = [1, 32], strides = [1, 1]} : vector<9x32xf32> to vector<1x32xf32>
    %46 = vector.broadcast %45 : vector<1x32xf32> to vector<16x32xf32>
    %47 = arith.mulf %44, %46 : vector<16x32xf32>
    %48 = arith.addf %43, %47 : vector<16x32xf32>
    %49 = vector.extract_strided_slice %22 {offsets = [80, 0], sizes = [16, 32], strides = [1, 1]} : vector<144x32xf32> to vector<16x32xf32>
    %50 = vector.extract_strided_slice %24 {offsets = [5, 0], sizes = [1, 32], strides = [1, 1]} : vector<9x32xf32> to vector<1x32xf32>
    %51 = vector.broadcast %50 : vector<1x32xf32> to vector<16x32xf32>
    %52 = arith.mulf %49, %51 : vector<16x32xf32>
    %53 = arith.addf %48, %52 : vector<16x32xf32>
    %54 = vector.extract_strided_slice %22 {offsets = [96, 0], sizes = [16, 32], strides = [1, 1]} : vector<144x32xf32> to vector<16x32xf32>
    %55 = vector.extract_strided_slice %24 {offsets = [6, 0], sizes = [1, 32], strides = [1, 1]} : vector<9x32xf32> to vector<1x32xf32>
    %56 = vector.broadcast %55 : vector<1x32xf32> to vector<16x32xf32>
    %57 = arith.mulf %54, %56 : vector<16x32xf32>
    %58 = arith.addf %53, %57 : vector<16x32xf32>
    %59 = vector.extract_strided_slice %22 {offsets = [112, 0], sizes = [16, 32], strides = [1, 1]} : vector<144x32xf32> to vector<16x32xf32>
    %60 = vector.extract_strided_slice %24 {offsets = [7, 0], sizes = [1, 32], strides = [1, 1]} : vector<9x32xf32> to vector<1x32xf32>
    %61 = vector.broadcast %60 : vector<1x32xf32> to vector<16x32xf32>
    %62 = arith.mulf %59, %61 : vector<16x32xf32>
    %63 = arith.addf %58, %62 : vector<16x32xf32>
    %64 = vector.extract_strided_slice %22 {offsets = [128, 0], sizes = [16, 32], strides = [1, 1]} : vector<144x32xf32> to vector<16x32xf32>
    %65 = vector.extract_strided_slice %24 {offsets = [8, 0], sizes = [1, 32], strides = [1, 1]} : vector<9x32xf32> to vector<1x32xf32>
    %66 = vector.broadcast %65 : vector<1x32xf32> to vector<16x32xf32>
    %67 = arith.mulf %64, %66 : vector<16x32xf32>
    %68 = arith.addf %63, %67 : vector<16x32xf32>
    %c0_19 = arith.constant 0 : index
    %c0_20 = arith.constant 0 : index
    %c0_21 = arith.constant 0 : index
    %69 = vector.load %arg9[%c0_19, %c0_20, %c0_21] : memref<2x1x32xf32, #tpu.memory_space<vmem>>, vector<1x1x32xf32>
    %70 = vector.shape_cast %69 : vector<1x1x32xf32> to vector<1x32xf32>
    %c0_22 = arith.constant 0 : index
    %c0_23 = arith.constant 0 : index
    %c0_24 = arith.constant 0 : index
    %71 = vector.load %arg8[%c0_22, %c0_23, %c0_24] : memref<2x1x32xf32, #tpu.memory_space<vmem>>, vector<1x1x32xf32>
    %72 = vector.shape_cast %71 : vector<1x1x32xf32> to vector<1x32xf32>
    %73 = vector.broadcast %72 : vector<1x32xf32> to vector<16x32xf32>
    %74 = arith.addf %68, %73 : vector<16x32xf32>
    %cst_25 = arith.constant 5.000000e-01 : f32
    %75 = vector.broadcast %cst_25 : f32 to vector<16x32xf32>
    %76 = arith.mulf %75, %74 : vector<16x32xf32>
    %cst_26 = arith.constant 0.707106769 : f32
    %77 = vector.broadcast %cst_26 : f32 to vector<16x32xf32>
    %78 = arith.mulf %74, %77 : vector<16x32xf32>
    %79 = math.erf %78 : vector<16x32xf32>
    %cst_27 = arith.constant 1.000000e+00 : f32
    %80 = vector.broadcast %cst_27 : f32 to vector<16x32xf32>
    %81 = arith.addf %80, %79 : vector<16x32xf32>
    %82 = arith.mulf %76, %81 : vector<16x32xf32>
    %83 = vector.broadcast %70 : vector<1x32xf32> to vector<16x32xf32>
    %84 = arith.mulf %83, %82 : vector<16x32xf32>
    %c0_28 = arith.constant 0 : index
    %c0_29 = arith.constant 0 : index
    %c0_30 = arith.constant 0 : index
    %85 = vector.load %arg10[%c0_28, %c0_29, %c0_30] : memref<2x1x32xf32, #tpu.memory_space<vmem>>, vector<1x1x32xf32>
    %86 = vector.shape_cast %85 : vector<1x1x32xf32> to vector<1x32xf32>
    %87 = vector.broadcast %86 : vector<1x32xf32> to vector<16x32xf32>
    %88 = arith.addf %84, %87 : vector<16x32xf32>
    %89 = arith.addf %88, %20 : vector<16x32xf32>
    %c0_31 = arith.constant 0 : index
    %c0_32 = arith.constant 0 : index
    %c0_33 = arith.constant 0 : index
    %90 = vector.load %arg11[%c0_31, %c0_32, %c0_33] : memref<2x32x32xf32, #tpu.memory_space<vmem>>, vector<1x32x32xf32>
    %91 = vector.shape_cast %90 : vector<1x32x32xf32> to vector<32x32xf32>
    %cst_34 = arith.constant dense<0.000000e+00> : vector<16x32xf32>
    %92 = tpu.matmul %89, %91, %cst_34 {dimension_numbers = #tpu.dot_dimension_numbers<[1], [0], [0], [1], [0, 0, 1, 1], [], []>} : vector<16x32xf32>, vector<32x32xf32>, vector<16x32xf32> -> vector<16x32xf32>
    %c0_35 = arith.constant 0 : index
    %c0_36 = arith.constant 0 : index
    %c0_37 = arith.constant 0 : index
    %93 = vector.load %arg13[%c0_35, %c0_36, %c0_37] : memref<2x1x32xf32, #tpu.memory_space<vmem>>, vector<1x1x32xf32>
    %94 = vector.shape_cast %93 : vector<1x1x32xf32> to vector<1x32xf32>
    %c0_38 = arith.constant 0 : index
    %c0_39 = arith.constant 0 : index
    %c0_40 = arith.constant 0 : index
    %95 = vector.load %arg12[%c0_38, %c0_39, %c0_40] : memref<2x1x32xf32, #tpu.memory_space<vmem>>, vector<1x1x32xf32>
    %96 = vector.shape_cast %95 : vector<1x1x32xf32> to vector<1x32xf32>
    %97 = vector.broadcast %96 : vector<1x32xf32> to vector<16x32xf32>
    %98 = arith.addf %92, %97 : vector<16x32xf32>
    %cst_41 = arith.constant 5.000000e-01 : f32
    %99 = vector.broadcast %cst_41 : f32 to vector<16x32xf32>
    %100 = arith.mulf %99, %98 : vector<16x32xf32>
    %cst_42 = arith.constant 0.707106769 : f32
    %101 = vector.broadcast %cst_42 : f32 to vector<16x32xf32>
    %102 = arith.mulf %98, %101 : vector<16x32xf32>
    %103 = math.erf %102 : vector<16x32xf32>
    %cst_43 = arith.constant 1.000000e+00 : f32
    %104 = vector.broadcast %cst_43 : f32 to vector<16x32xf32>
    %105 = arith.addf %104, %103 : vector<16x32xf32>
    %106 = arith.mulf %100, %105 : vector<16x32xf32>
    %107 = vector.broadcast %94 : vector<1x32xf32> to vector<16x32xf32>
    %108 = arith.mulf %107, %106 : vector<16x32xf32>
    %c0_44 = arith.constant 0 : index
    %c0_45 = arith.constant 0 : index
    %c0_46 = arith.constant 0 : index
    %109 = vector.load %arg14[%c0_44, %c0_45, %c0_46] : memref<2x1x32xf32, #tpu.memory_space<vmem>>, vector<1x1x32xf32>
    %110 = vector.shape_cast %109 : vector<1x1x32xf32> to vector<1x32xf32>
    %111 = vector.broadcast %110 : vector<1x32xf32> to vector<16x32xf32>
    %112 = arith.addf %108, %111 : vector<16x32xf32>
    %cst_47 = arith.constant dense<0.000000e+00> : vector<144x32xf32>
    %113 = tpu.matmul %21, %112, %cst_47 {dimension_numbers = #tpu.dot_dimension_numbers<[1], [0], [0], [1], [0, 0, 1, 1], [], []>} : vector<144x16xf32>, vector<16x32xf32>, vector<144x32xf32> -> vector<144x32xf32>
    %c1 = arith.constant 1 : index
    %c0_48 = arith.constant 0 : index
    %c0_49 = arith.constant 0 : index
    %114 = vector.load %arg7[%c1, %c0_48, %c0_49] : memref<2x9x32xf32, #tpu.memory_space<vmem>>, vector<1x9x32xf32>
    %115 = vector.shape_cast %114 : vector<1x9x32xf32> to vector<9x32xf32>
    %116 = vector.extract_strided_slice %113 {offsets = [0, 0], sizes = [16, 32], strides = [1, 1]} : vector<144x32xf32> to vector<16x32xf32>
    %117 = vector.extract_strided_slice %115 {offsets = [0, 0], sizes = [1, 32], strides = [1, 1]} : vector<9x32xf32> to vector<1x32xf32>
    %118 = vector.broadcast %117 : vector<1x32xf32> to vector<16x32xf32>
    %119 = arith.mulf %116, %118 : vector<16x32xf32>
    %120 = vector.extract_strided_slice %113 {offsets = [16, 0], sizes = [16, 32], strides = [1, 1]} : vector<144x32xf32> to vector<16x32xf32>
    %121 = vector.extract_strided_slice %115 {offsets = [1, 0], sizes = [1, 32], strides = [1, 1]} : vector<9x32xf32> to vector<1x32xf32>
    %122 = vector.broadcast %121 : vector<1x32xf32> to vector<16x32xf32>
    %123 = arith.mulf %120, %122 : vector<16x32xf32>
    %124 = arith.addf %119, %123 : vector<16x32xf32>
    %125 = vector.extract_strided_slice %113 {offsets = [32, 0], sizes = [16, 32], strides = [1, 1]} : vector<144x32xf32> to vector<16x32xf32>
    %126 = vector.extract_strided_slice %115 {offsets = [2, 0], sizes = [1, 32], strides = [1, 1]} : vector<9x32xf32> to vector<1x32xf32>
    %127 = vector.broadcast %126 : vector<1x32xf32> to vector<16x32xf32>
    %128 = arith.mulf %125, %127 : vector<16x32xf32>
    %129 = arith.addf %124, %128 : vector<16x32xf32>
    %130 = vector.extract_strided_slice %113 {offsets = [48, 0], sizes = [16, 32], strides = [1, 1]} : vector<144x32xf32> to vector<16x32xf32>
    %131 = vector.extract_strided_slice %115 {offsets = [3, 0], sizes = [1, 32], strides = [1, 1]} : vector<9x32xf32> to vector<1x32xf32>
    %132 = vector.broadcast %131 : vector<1x32xf32> to vector<16x32xf32>
    %133 = arith.mulf %130, %132 : vector<16x32xf32>
    %134 = arith.addf %129, %133 : vector<16x32xf32>
    %135 = vector.extract_strided_slice %113 {offsets = [64, 0], sizes = [16, 32], strides = [1, 1]} : vector<144x32xf32> to vector<16x32xf32>
    %136 = vector.extract_strided_slice %115 {offsets = [4, 0], sizes = [1, 32], strides = [1, 1]} : vector<9x32xf32> to vector<1x32xf32>
    %137 = vector.broadcast %136 : vector<1x32xf32> to vector<16x32xf32>
    %138 = arith.mulf %135, %137 : vector<16x32xf32>
    %139 = arith.addf %134, %138 : vector<16x32xf32>
    %140 = vector.extract_strided_slice %113 {offsets = [80, 0], sizes = [16, 32], strides = [1, 1]} : vector<144x32xf32> to vector<16x32xf32>
    %141 = vector.extract_strided_slice %115 {offsets = [5, 0], sizes = [1, 32], strides = [1, 1]} : vector<9x32xf32> to vector<1x32xf32>
    %142 = vector.broadcast %141 : vector<1x32xf32> to vector<16x32xf32>
    %143 = arith.mulf %140, %142 : vector<16x32xf32>
    %144 = arith.addf %139, %143 : vector<16x32xf32>
    %145 = vector.extract_strided_slice %113 {offsets = [96, 0], sizes = [16, 32], strides = [1, 1]} : vector<144x32xf32> to vector<16x32xf32>
    %146 = vector.extract_strided_slice %115 {offsets = [6, 0], sizes = [1, 32], strides = [1, 1]} : vector<9x32xf32> to vector<1x32xf32>
    %147 = vector.broadcast %146 : vector<1x32xf32> to vector<16x32xf32>
    %148 = arith.mulf %145, %147 : vector<16x32xf32>
    %149 = arith.addf %144, %148 : vector<16x32xf32>
    %150 = vector.extract_strided_slice %113 {offsets = [112, 0], sizes = [16, 32], strides = [1, 1]} : vector<144x32xf32> to vector<16x32xf32>
    %151 = vector.extract_strided_slice %115 {offsets = [7, 0], sizes = [1, 32], strides = [1, 1]} : vector<9x32xf32> to vector<1x32xf32>
    %152 = vector.broadcast %151 : vector<1x32xf32> to vector<16x32xf32>
    %153 = arith.mulf %150, %152 : vector<16x32xf32>
    %154 = arith.addf %149, %153 : vector<16x32xf32>
    %155 = vector.extract_strided_slice %113 {offsets = [128, 0], sizes = [16, 32], strides = [1, 1]} : vector<144x32xf32> to vector<16x32xf32>
    %156 = vector.extract_strided_slice %115 {offsets = [8, 0], sizes = [1, 32], strides = [1, 1]} : vector<9x32xf32> to vector<1x32xf32>
    %157 = vector.broadcast %156 : vector<1x32xf32> to vector<16x32xf32>
    %158 = arith.mulf %155, %157 : vector<16x32xf32>
    %159 = arith.addf %154, %158 : vector<16x32xf32>
    %c1_50 = arith.constant 1 : index
    %c0_51 = arith.constant 0 : index
    %c0_52 = arith.constant 0 : index
    %160 = vector.load %arg9[%c1_50, %c0_51, %c0_52] : memref<2x1x32xf32, #tpu.memory_space<vmem>>, vector<1x1x32xf32>
    %161 = vector.shape_cast %160 : vector<1x1x32xf32> to vector<1x32xf32>
    %c1_53 = arith.constant 1 : index
    %c0_54 = arith.constant 0 : index
    %c0_55 = arith.constant 0 : index
    %162 = vector.load %arg8[%c1_53, %c0_54, %c0_55] : memref<2x1x32xf32, #tpu.memory_space<vmem>>, vector<1x1x32xf32>
    %163 = vector.shape_cast %162 : vector<1x1x32xf32> to vector<1x32xf32>
    %164 = vector.broadcast %163 : vector<1x32xf32> to vector<16x32xf32>
    %165 = arith.addf %159, %164 : vector<16x32xf32>
    %cst_56 = arith.constant 5.000000e-01 : f32
    %166 = vector.broadcast %cst_56 : f32 to vector<16x32xf32>
    %167 = arith.mulf %166, %165 : vector<16x32xf32>
    %cst_57 = arith.constant 0.707106769 : f32
    %168 = vector.broadcast %cst_57 : f32 to vector<16x32xf32>
    %169 = arith.mulf %165, %168 : vector<16x32xf32>
    %170 = math.erf %169 : vector<16x32xf32>
    %cst_58 = arith.constant 1.000000e+00 : f32
    %171 = vector.broadcast %cst_58 : f32 to vector<16x32xf32>
    %172 = arith.addf %171, %170 : vector<16x32xf32>
    %173 = arith.mulf %167, %172 : vector<16x32xf32>
    %174 = vector.broadcast %161 : vector<1x32xf32> to vector<16x32xf32>
    %175 = arith.mulf %174, %173 : vector<16x32xf32>
    %c1_59 = arith.constant 1 : index
    %c0_60 = arith.constant 0 : index
    %c0_61 = arith.constant 0 : index
    %176 = vector.load %arg10[%c1_59, %c0_60, %c0_61] : memref<2x1x32xf32, #tpu.memory_space<vmem>>, vector<1x1x32xf32>
    %177 = vector.shape_cast %176 : vector<1x1x32xf32> to vector<1x32xf32>
    %178 = vector.broadcast %177 : vector<1x32xf32> to vector<16x32xf32>
    %179 = arith.addf %175, %178 : vector<16x32xf32>
    %180 = arith.addf %179, %112 : vector<16x32xf32>
    %c1_62 = arith.constant 1 : index
    %c0_63 = arith.constant 0 : index
    %c0_64 = arith.constant 0 : index
    %181 = vector.load %arg11[%c1_62, %c0_63, %c0_64] : memref<2x32x32xf32, #tpu.memory_space<vmem>>, vector<1x32x32xf32>
    %182 = vector.shape_cast %181 : vector<1x32x32xf32> to vector<32x32xf32>
    %cst_65 = arith.constant dense<0.000000e+00> : vector<16x32xf32>
    %183 = tpu.matmul %180, %182, %cst_65 {dimension_numbers = #tpu.dot_dimension_numbers<[1], [0], [0], [1], [0, 0, 1, 1], [], []>} : vector<16x32xf32>, vector<32x32xf32>, vector<16x32xf32> -> vector<16x32xf32>
    %c1_66 = arith.constant 1 : index
    %c0_67 = arith.constant 0 : index
    %c0_68 = arith.constant 0 : index
    %184 = vector.load %arg13[%c1_66, %c0_67, %c0_68] : memref<2x1x32xf32, #tpu.memory_space<vmem>>, vector<1x1x32xf32>
    %185 = vector.shape_cast %184 : vector<1x1x32xf32> to vector<1x32xf32>
    %c1_69 = arith.constant 1 : index
    %c0_70 = arith.constant 0 : index
    %c0_71 = arith.constant 0 : index
    %186 = vector.load %arg12[%c1_69, %c0_70, %c0_71] : memref<2x1x32xf32, #tpu.memory_space<vmem>>, vector<1x1x32xf32>
    %187 = vector.shape_cast %186 : vector<1x1x32xf32> to vector<1x32xf32>
    %188 = vector.broadcast %187 : vector<1x32xf32> to vector<16x32xf32>
    %189 = arith.addf %183, %188 : vector<16x32xf32>
    %cst_72 = arith.constant 5.000000e-01 : f32
    %190 = vector.broadcast %cst_72 : f32 to vector<16x32xf32>
    %191 = arith.mulf %190, %189 : vector<16x32xf32>
    %cst_73 = arith.constant 0.707106769 : f32
    %192 = vector.broadcast %cst_73 : f32 to vector<16x32xf32>
    %193 = arith.mulf %189, %192 : vector<16x32xf32>
    %194 = math.erf %193 : vector<16x32xf32>
    %cst_74 = arith.constant 1.000000e+00 : f32
    %195 = vector.broadcast %cst_74 : f32 to vector<16x32xf32>
    %196 = arith.addf %195, %194 : vector<16x32xf32>
    %197 = arith.mulf %191, %196 : vector<16x32xf32>
    %198 = vector.broadcast %185 : vector<1x32xf32> to vector<16x32xf32>
    %199 = arith.mulf %198, %197 : vector<16x32xf32>
    %c1_75 = arith.constant 1 : index
    %c0_76 = arith.constant 0 : index
    %c0_77 = arith.constant 0 : index
    %200 = vector.load %arg14[%c1_75, %c0_76, %c0_77] : memref<2x1x32xf32, #tpu.memory_space<vmem>>, vector<1x1x32xf32>
    %201 = vector.shape_cast %200 : vector<1x1x32xf32> to vector<1x32xf32>
    %202 = vector.broadcast %201 : vector<1x32xf32> to vector<16x32xf32>
    %203 = arith.addf %199, %202 : vector<16x32xf32>
    %c0_78 = arith.constant 0 : index
    %c0_79 = arith.constant 0 : index
    %204 = vector.load %arg15[%c0_78, %c0_79] : memref<32x128xf32, #tpu.memory_space<vmem>>, vector<32x128xf32>
    %cst_80 = arith.constant dense<0.000000e+00> : vector<16x128xf32>
    %205 = tpu.matmul %203, %204, %cst_80 {dimension_numbers = #tpu.dot_dimension_numbers<[1], [0], [0], [1], [0, 0, 1, 1], [], []>} : vector<16x32xf32>, vector<32x128xf32>, vector<16x128xf32> -> vector<16x128xf32>
    %cst_81 = arith.constant dense<0.000000e+00> : vector<128xf32>
    %206 = vector.multi_reduction <add>, %205, %cst_81 [0] : vector<16x128xf32> to vector<128xf32>
    %207 = vector.shape_cast %206 : vector<128xf32> to vector<1x128xf32>
    %cst_82 = arith.constant 1.600000e+01 : f32
    %208 = vector.broadcast %cst_82 : f32 to vector<1x128xf32>
    %209 = arith.divf %207, %208 : vector<1x128xf32>
    %c0_83 = arith.constant 0 : index
    %c0_84 = arith.constant 0 : index
    %210 = vector.load %arg16[%c0_83, %c0_84] : memref<1x128xf32, #tpu.memory_space<vmem>>, vector<1x128xf32>
    %211 = arith.addf %209, %210 : vector<1x128xf32>
    %c0_85 = arith.constant 0 : index
    %c0_86 = arith.constant 0 : index
    %c0_87 = arith.constant 0 : index
    %212 = vector.load %arg17[%c0_85, %c0_86, %c0_87] : memref<1x1x128xf32, #tpu.memory_space<vmem>>, vector<1x1x128xf32>
    %213 = vector.shape_cast %212 : vector<1x1x128xf32> to vector<1x128xf32>
    %214 = vector.shape_cast %211 : vector<1x128xf32> to vector<1x1x128xf32>
    tpu.vector_store %arg17[%c0_85, %c0_86, %c0_87], %214 {strides = array<i32>} : memref<1x1x128xf32, #tpu.memory_space<vmem>>, vector<1x1x128xf32>,
    return
  }
  func.func @transform_0(%arg0: i32) -> (i32, i32, i32) {
    %c0_i32 = arith.constant 0 : i32
    %c0_i32_0 = arith.constant 0 : i32
    %c0_i32_1 = arith.constant 0 : i32
    return %arg0, %c0_i32, %c0_i32_0 : i32, i32, i32
  }
  func.func @transform_1(%arg0: i32) -> (i32, i32) {
    %c0_i32 = arith.constant 0 : i32
    %c0_i32_0 = arith.constant 0 : i32
    %c0_i32_1 = arith.constant 0 : i32
    return %c0_i32, %c0_i32_0 : i32, i32
  }
  func.func @transform_2(%arg0: i32) -> (i32, i32) {
    %c0_i32 = arith.constant 0 : i32
    %c0_i32_0 = arith.constant 0 : i32
    %c0_i32_1 = arith.constant 0 : i32
    return %c0_i32, %c0_i32_0 : i32, i32
  }
  func.func @transform_3(%arg0: i32) -> (i32, i32) {
    %c0_i32 = arith.constant 0 : i32
    %c0_i32_0 = arith.constant 0 : i32
    %c0_i32_1 = arith.constant 0 : i32
    return %c0_i32, %c0_i32_0 : i32, i32
  }
  func.func @transform_4(%arg0: i32) -> (i32, i32) {
    %c0_i32 = arith.constant 0 : i32
    %c0_i32_0 = arith.constant 0 : i32
    %c0_i32_1 = arith.constant 0 : i32
    return %c0_i32, %c0_i32_0 : i32, i32
  }
  func.func @transform_5(%arg0: i32) -> (i32, i32) {
    %c0_i32 = arith.constant 0 : i32
    %c0_i32_0 = arith.constant 0 : i32
    %c0_i32_1 = arith.constant 0 : i32
    return %c0_i32, %c0_i32_0 : i32, i32
  }
  func.func @transform_6(%arg0: i32) -> (i32, i32, i32) {
    %c0_i32 = arith.constant 0 : i32
    %c0_i32_0 = arith.constant 0 : i32
    %c0_i32_1 = arith.constant 0 : i32
    %c0_i32_2 = arith.constant 0 : i32
    return %c0_i32, %c0_i32_0, %c0_i32_1 : i32, i32, i32
  }
  func.func @transform_7(%arg0: i32) -> (i32, i32, i32) {
    %c0_i32 = arith.constant 0 : i32
    %c0_i32_0 = arith.constant 0 : i32
    %c0_i32_1 = arith.constant 0 : i32
    %c0_i32_2 = arith.constant 0 : i32
    return %c0_i32, %c0_i32_0, %c0_i32_1 : i32, i32, i32
  }
  func.func @transform_8(%arg0: i32) -> (i32, i32, i32) {
    %c0_i32 = arith.constant 0 : i32
    %c0_i32_0 = arith.constant 0 : i32
    %c0_i32_1 = arith.constant 0 : i32
    %c0_i32_2 = arith.constant 0 : i32
    return %c0_i32, %c0_i32_0, %c0_i32_1 : i32, i32, i32
  }
  func.func @transform_9(%arg0: i32) -> (i32, i32, i32) {
    %c0_i32 = arith.constant 0 : i32
    %c0_i32_0 = arith.constant 0 : i32
    %c0_i32_1 = arith.constant 0 : i32
    %c0_i32_2 = arith.constant 0 : i32
    return %c0_i32, %c0_i32_0, %c0_i32_1 : i32, i32, i32
  }
  func.func @transform_10(%arg0: i32) -> (i32, i32, i32) {
    %c0_i32 = arith.constant 0 : i32
    %c0_i32_0 = arith.constant 0 : i32
    %c0_i32_1 = arith.constant 0 : i32
    %c0_i32_2 = arith.constant 0 : i32
    return %c0_i32, %c0_i32_0, %c0_i32_1 : i32, i32, i32
  }
  func.func @transform_11(%arg0: i32) -> (i32, i32, i32) {
    %c0_i32 = arith.constant 0 : i32
    %c0_i32_0 = arith.constant 0 : i32
    %c0_i32_1 = arith.constant 0 : i32
    %c0_i32_2 = arith.constant 0 : i32
    return %c0_i32, %c0_i32_0, %c0_i32_1 : i32, i32, i32
  }
  func.func @transform_12(%arg0: i32) -> (i32, i32, i32) {
    %c0_i32 = arith.constant 0 : i32
    %c0_i32_0 = arith.constant 0 : i32
    %c0_i32_1 = arith.constant 0 : i32
    %c0_i32_2 = arith.constant 0 : i32
    return %c0_i32, %c0_i32_0, %c0_i32_1 : i32, i32, i32
  }
  func.func @transform_13(%arg0: i32) -> (i32, i32, i32) {
    %c0_i32 = arith.constant 0 : i32
    %c0_i32_0 = arith.constant 0 : i32
    %c0_i32_1 = arith.constant 0 : i32
    %c0_i32_2 = arith.constant 0 : i32
    return %c0_i32, %c0_i32_0, %c0_i32_1 : i32, i32, i32
  }
  func.func @transform_14(%arg0: i32) -> (i32, i32) {
    %c0_i32 = arith.constant 0 : i32
    %c0_i32_0 = arith.constant 0 : i32
    %c0_i32_1 = arith.constant 0 : i32
    return %c0_i32, %c0_i32_0 : i32, i32
  }
  func.func @transform_15(%arg0: i32) -> (i32, i32) {
    %c0_i32 = arith.constant 0 : i32
    %c0_i32_0 = arith.constant 0 : i32
    %c0_i32_1 = arith.constant 0 : i32
    return %c0_i32, %c0_i32_0 : i32, i32
  }
  func.func @transform_16(%arg0: i32) -> (i32, i32, i32) {
    %c0_i32 = arith.constant 0 : i32
    %c0_i32_0 = arith.constant 0 : i32
    %c0_i32_1 = arith.constant 0 : i32
    return %arg0, %c0_i32, %c0_i32_0 : i32, i32, i32
  }
}

</mosaic_0001>

<llo_original>
// kernel: convmixer_forward.1
$region0: #{convmixer_forward.1}
  #allocation0 [shape = 'u32[]', space=smem, size = 0x4, offset = 0x4, fixed_abs, tag = 'smem constant byte address 0x4 - core index']
  #allocation1 [shape = 'u32[144,128]{1,0:T(1,128)}', space=vmem, size = 0x12000, scoped, tag = 'internal scratch']
  %s0 = inlined_call_operand.vmem [shape: f32[2,16,48], index: 0, kind: input, shape index: {}]
  %s1 = inlined_call_operand.vmem [shape: f32[144,16], index: 1, kind: input, shape index: {}]
  %s2 = inlined_call_operand.vmem [shape: f32[48,32], index: 2, kind: input, shape index: {}]
  %s3 = inlined_call_operand.vmem [shape: f32[1,32], index: 3, kind: input, shape index: {}]
  %s4 = inlined_call_operand.vmem [shape: f32[1,32], index: 4, kind: input, shape index: {}]
  %s5 = inlined_call_operand.vmem [shape: f32[1,32], index: 5, kind: input, shape index: {}]
  %s6 = inlined_call_operand.vmem [shape: f32[2,9,32], index: 6, kind: input, shape index: {}]
  %s7 = inlined_call_operand.vmem [shape: f32[2,1,32], index: 7, kind: input, shape index: {}]
  %s8 = inlined_call_operand.vmem [shape: f32[2,1,32], index: 8, kind: input, shape index: {}]
  %s9 = inlined_call_operand.vmem [shape: f32[2,1,32], index: 9, kind: input, shape index: {}]
  %s10 = inlined_call_operand.vmem [shape: f32[2,32,32], index: 10, kind: input, shape index: {}]
  %s11 = inlined_call_operand.vmem [shape: f32[2,1,32], index: 11, kind: input, shape index: {}]
  %s12 = inlined_call_operand.vmem [shape: f32[2,1,32], index: 12, kind: input, shape index: {}]
  %s13 = inlined_call_operand.vmem [shape: f32[2,1,32], index: 13, kind: input, shape index: {}]
  %s14 = inlined_call_operand.vmem [shape: f32[32,128], index: 14, kind: input, shape index: {}]
  %s15 = inlined_call_operand.vmem [shape: f32[1,128], index: 15, kind: input, shape index: {}]
  %s16 = inlined_call_operand.hbm [shape: f32[2,1,128], index: 16, kind: output, shape index: {}]
  %s17 = sld [smem:[#allocation0]]
  $region97: #{convmixer_forward.1} parent=0
    _
  %s19 = ssub.s32 1, %s17
  %s20 = scalar_select 0, %s19, %s17
  $region1: #{convmixer_forward.1} parent=0
    #allocation2 [shape = 'u8[1024]{0}', space=vmem, size = 0x400, scoped, tag = 'output window, operand 0']
    #allocation3 [shape = 's32[2]{0}', space=sflag, size = 0x8, scoped, tag = 'scoped memory for convmixer_forward.1']
    %21 = vsyncpa [#allocation3], 0
    %s22 = scalar_lea.sflag [#allocation3], 1
    %23 = vsyncpa %s22, 0
    loop: start=0, step=1, limit=4
    $region2: #{convmixer_forward.1} parent=1 // loop_pre_header
      _
    $region3: #{convmixer_forward.1} parent=1 // loop_header
      %s25 = sphi 0, %s29
      %p26 = scmp.ge.s32.totalorder %s25, 4
      %s35 = sphi 0, %s37
      %s38 = sphi 0, %s35
      %s39 = sphi 0, %s38
      %s55 = sphi 0, %s39
      %s59 = sphi 0, %s59
      %s61 = sphi 0, %s59
      %s62 = sphi 0, %s61
      %s76 = sphi 0, %s62
      %s80 = sphi 0, %s80
      %s82 = sphi 0, %s80
      %s83 = sphi 0, %s82
      %s97 = sphi 0, %s83
      %s101 = sphi 0, %s101
      %s103 = sphi 0, %s101
      %s104 = sphi 0, %s103
      %s118 = sphi 0, %s104
      %s122 = sphi 0, %s122
      %s124 = sphi 0, %s122
      %s125 = sphi 0, %s124
      %s139 = sphi 0, %s125
      %s143 = sphi 0, %s143
      %s145 = sphi 0, %s143
      %s146 = sphi 0, %s145
      %s160 = sphi 0, %s146
      %s164 = sphi 0, %s164
      %s166 = sphi 0, %s164
      %s167 = sphi 0, %s166
      %s181 = sphi 0, %s167
      %s185 = sphi 0, %s185
      %s187 = sphi 0, %s185
      %s188 = sphi 0, %s187
      %s202 = sphi 0, %s188
      %s206 = sphi 0, %s206
      %s208 = sphi 0, %s206
      %s209 = sphi 0, %s208
      %s223 = sphi 0, %s209
      %s227 = sphi 0, %s227
      %s229 = sphi 0, %s227
      %s230 = sphi 0, %s229
      %s244 = sphi 0, %s230
      %s248 = sphi 0, %s248
      %s250 = sphi 0, %s248
      %s251 = sphi 0, %s250
      %s265 = sphi 0, %s251
      %s269 = sphi 0, %s269
      %s271 = sphi 0, %s269
      %s272 = sphi 0, %s271
      %s286 = sphi 0, %s272
      %s290 = sphi 0, %s290
      %s292 = sphi 0, %s290
      %s293 = sphi 0, %s292
      %s307 = sphi 0, %s293
      %s311 = sphi 0, %s311
      %s313 = sphi 0, %s311
      %s314 = sphi 0, %s313
      %s328 = sphi 0, %s314
      %s332 = sphi 0, %s332
      %s334 = sphi 0, %s332
      %s335 = sphi 0, %s334
      %s349 = sphi 0, %s335
      %s353 = sphi 0, %s353
      %s355 = sphi 0, %s353
      %s356 = sphi 0, %s355
      %s370 = sphi 0, %s356
      %s376 = sphi 0, %s378
      %s379 = sphi 0, %s376
      %s380 = sphi 0, %s379
      %s396 = sphi 0, %s380
    $region4: #{convmixer_forward.1} parent=1 // loop_header_branch
      %28 = sbr.rel (%p26) target = $region8
    $region5: #{convmixer_forward.1} parent=1 // loop_body
      %s30 = ssub.s32 %s25, 1
      %s31 = ssub.s32 %s25, 2
      %s32 = sadd.s32 %s25, 1
      %s33 = ssub.s32 %s25, %s32
      %p34 = scmp.eq.s32.totalorder %s33, 0
      %s36 = sadd.s32 %s35, 1
      %s37 = scalar_select %p34, %s35, %s36
      %p40 = pneg %p34
      %p41 = scmp.eq.s32.totalorder %s25, 1
      %p42 = por %p40, %p41
      %p43 = scmp.ne.s32.totalorder %s35, %s38
      %p44 = scmp.eq.s32.totalorder %s25, 0
      %p45 = por %p43, %p44
      %p46 = scmp.ne.s32.totalorder %s35, %s38
      %p47 = scmp.eq.s32.totalorder %s30, 1
      %p48 = por %p46, %p47
      %p49 = scmp.ne.s32.totalorder %s38, %s39
      %p50 = scmp.eq.s32.totalorder %s30, 0
      %p51 = por %p49, %p50
      %p52 = scmp.ne.s32.totalorder %s38, %s39
      %p53 = scmp.eq.s32.totalorder %s31, 1
      %p54 = por %p52, %p53
      %p56 = scmp.ne.s32.totalorder %s39, %s55
      %p57 = scmp.eq.s32.totalorder %s31, 0
      %p58 = por %p56, %p57
      %s60 = sadd.s32 %s59, 1
      %p63 = scmp.eq.s32.totalorder %s25, 1
      %p64 = scmp.ne.s32.totalorder %s59, %s61
      %p65 = scmp.eq.s32.totalorder %s25, 0
      %p66 = por %p64, %p65
      %p67 = scmp.ne.s32.totalorder %s59, %s61
      %p68 = scmp.eq.s32.totalorder %s30, 1
      %p69 = por %p67, %p68
      %p70 = scmp.ne.s32.totalorder %s61, %s62
      %p71 = scmp.eq.s32.totalorder %s30, 0
      %p72 = por %p70, %p71
      %p73 = scmp.ne.s32.totalorder %s61, %s62
      %p74 = scmp.eq.s32.totalorder %s31, 1
      %p75 = por %p73, %p74
      %p77 = scmp.ne.s32.totalorder %s62, %s76
      %p78 = scmp.eq.s32.totalorder %s31, 0
      %p79 = por %p77, %p78
      %s81 = sadd.s32 %s80, 1
      %p84 = scmp.eq.s32.totalorder %s25, 1
      %p85 = scmp.ne.s32.totalorder %s80, %s82
      %p86 = scmp.eq.s32.totalorder %s25, 0
      %p87 = por %p85, %p86
      %p88 = scmp.ne.s32.totalorder %s80, %s82
      %p89 = scmp.eq.s32.totalorder %s30, 1
      %p90 = por %p88, %p89
      %p91 = scmp.ne.s32.totalorder %s82, %s83
      %p92 = scmp.eq.s32.totalorder %s30, 0
      %p93 = por %p91, %p92
      %p94 = scmp.ne.s32.totalorder %s82, %s83
      %p95 = scmp.eq.s32.totalorder %s31, 1
      %p96 = por %p94, %p95
      %p98 = scmp.ne.s32.totalorder %s83, %s97
      %p99 = scmp.eq.s32.totalorder %s31, 0
      %p100 = por %p98, %p99
      %s102 = sadd.s32 %s101, 1
      %p105 = scmp.eq.s32.totalorder %s25, 1
      %p106 = scmp.ne.s32.totalorder %s101, %s103
      %p107 = scmp.eq.s32.totalorder %s25, 0
      %p108 = por %p106, %p107
      %p109 = scmp.ne.s32.totalorder %s101, %s103
      %p110 = scmp.eq.s32.totalorder %s30, 1
      %p111 = por %p109, %p110
      %p112 = scmp.ne.s32.totalorder %s103, %s104
      %p113 = scmp.eq.s32.totalorder %s30, 0
      %p114 = por %p112, %p113
      %p115 = scmp.ne.s32.totalorder %s103, %s104
      %p116 = scmp.eq.s32.totalorder %s31, 1
      %p117 = por %p115, %p116
      %p119 = scmp.ne.s32.totalorder %s104, %s118
      %p120 = scmp.eq.s32.totalorder %s31, 0
      %p121 = por %p119, %p120
      %s123 = sadd.s32 %s122, 1
      %p126 = scmp.eq.s32.totalorder %s25, 1
      %p127 = scmp.ne.s32.totalorder %s122, %s124
      %p128 = scmp.eq.s32.totalorder %s25, 0
      %p129 = por %p127, %p128
      %p130 = scmp.ne.s32.totalorder %s122, %s124
      %p131 = scmp.eq.s32.totalorder %s30, 1
      %p132 = por %p130, %p131
      %p133 = scmp.ne.s32.totalorder %s124, %s125
      %p134 = scmp.eq.s32.totalorder %s30, 0
      %p135 = por %p133, %p134
      %p136 = scmp.ne.s32.totalorder %s124, %s125
      %p137 = scmp.eq.s32.totalorder %s31, 1
      %p138 = por %p136, %p137
      %p140 = scmp.ne.s32.totalorder %s125, %s139
      %p141 = scmp.eq.s32.totalorder %s31, 0
      %p142 = por %p140, %p141
      %s144 = sadd.s32 %s143, 1
      %p147 = scmp.eq.s32.totalorder %s25, 1
      %p148 = scmp.ne.s32.totalorder %s143, %s145
      %p149 = scmp.eq.s32.totalorder %s25, 0
      %p150 = por %p148, %p149
      %p151 = scmp.ne.s32.totalorder %s143, %s145
      %p152 = scmp.eq.s32.totalorder %s30, 1
      %p153 = por %p151, %p152
      %p154 = scmp.ne.s32.totalorder %s145, %s146
      %p155 = scmp.eq.s32.totalorder %s30, 0
      %p156 = por %p154, %p155
      %p157 = scmp.ne.s32.totalorder %s145, %s146
      %p158 = scmp.eq.s32.totalorder %s31, 1
      %p159 = por %p157, %p158
      %p161 = scmp.ne.s32.totalorder %s146, %s160
      %p162 = scmp.eq.s32.totalorder %s31, 0
      %p163 = por %p161, %p162
      %s165 = sadd.s32 %s164, 1
      %p168 = scmp.eq.s32.totalorder %s25, 1
      %p169 = scmp.ne.s32.totalorder %s164, %s166
      %p170 = scmp.eq.s32.totalorder %s25, 0
      %p171 = por %p169, %p170
      %p172 = scmp.ne.s32.totalorder %s164, %s166
      %p173 = scmp.eq.s32.totalorder %s30, 1
      %p174 = por %p172, %p173
      %p175 = scmp.ne.s32.totalorder %s166, %s167
      %p176 = scmp.eq.s32.totalorder %s30, 0
      %p177 = por %p175, %p176
      %p178 = scmp.ne.s32.totalorder %s166, %s167
      %p179 = scmp.eq.s32.totalorder %s31, 1
      %p180 = por %p178, %p179
      %p182 = scmp.ne.s32.totalorder %s167, %s181
      %p183 = scmp.eq.s32.totalorder %s31, 0
      %p184 = por %p182, %p183
      %s186 = sadd.s32 %s185, 1
      %p189 = scmp.eq.s32.totalorder %s25, 1
      %p190 = scmp.ne.s32.totalorder %s185, %s187
      %p191 = scmp.eq.s32.totalorder %s25, 0
      %p192 = por %p190, %p191
      %p193 = scmp.ne.s32.totalorder %s185, %s187
      %p194 = scmp.eq.s32.totalorder %s30, 1
      %p195 = por %p193, %p194
      %p196 = scmp.ne.s32.totalorder %s187, %s188
      %p197 = scmp.eq.s32.totalorder %s30, 0
      %p198 = por %p196, %p197
      %p199 = scmp.ne.s32.totalorder %s187, %s188
      %p200 = scmp.eq.s32.totalorder %s31, 1
      %p201 = por %p199, %p200
      %p203 = scmp.ne.s32.totalorder %s188, %s202
      %p204 = scmp.eq.s32.totalorder %s31, 0
      %p205 = por %p203, %p204
      %s207 = sadd.s32 %s206, 1
      %p210 = scmp.eq.s32.totalorder %s25, 1
      %p211 = scmp.ne.s32.totalorder %s206, %s208
      %p212 = scmp.eq.s32.totalorder %s25, 0
      %p213 = por %p211, %p212
      %p214 = scmp.ne.s32.totalorder %s206, %s208
      %p215 = scmp.eq.s32.totalorder %s30, 1
      %p216 = por %p214, %p215
      %p217 = scmp.ne.s32.totalorder %s208, %s209
      %p218 = scmp.eq.s32.totalorder %s30, 0
      %p219 = por %p217, %p218
      %p220 = scmp.ne.s32.totalorder %s208, %s209
      %p221 = scmp.eq.s32.totalorder %s31, 1
      %p222 = por %p220, %p221
      %p224 = scmp.ne.s32.totalorder %s209, %s223
      %p225 = scmp.eq.s32.totalorder %s31, 0
      %p226 = por %p224, %p225
      %s228 = sadd.s32 %s227, 1
      %p231 = scmp.eq.s32.totalorder %s25, 1
      %p232 = scmp.ne.s32.totalorder %s227, %s229
      %p233 = scmp.eq.s32.totalorder %s25, 0
      %p234 = por %p232, %p233
      %p235 = scmp.ne.s32.totalorder %s227, %s229
      %p236 = scmp.eq.s32.totalorder %s30, 1
      %p237 = por %p235, %p236
      %p238 = scmp.ne.s32.totalorder %s229, %s230
      %p239 = scmp.eq.s32.totalorder %s30, 0
      %p240 = por %p238, %p239
      %p241 = scmp.ne.s32.totalorder %s229, %s230
      %p242 = scmp.eq.s32.totalorder %s31, 1
      %p243 = por %p241, %p242
      %p245 = scmp.ne.s32.totalorder %s230, %s244
      %p246 = scmp.eq.s32.totalorder %s31, 0
      %p247 = por %p245, %p246
      %s249 = sadd.s32 %s248, 1
      %p252 = scmp.eq.s32.totalorder %s25, 1
      %p253 = scmp.ne.s32.totalorder %s248, %s250
      %p254 = scmp.eq.s32.totalorder %s25, 0
      %p255 = por %p253, %p254
      %p256 = scmp.ne.s32.totalorder %s248, %s250
      %p257 = scmp.eq.s32.totalorder %s30, 1
      %p258 = por %p256, %p257
      %p259 = scmp.ne.s32.totalorder %s250, %s251
      %p260 = scmp.eq.s32.totalorder %s30, 0
      %p261 = por %p259, %p260
      %p262 = scmp.ne.s32.totalorder %s250, %s251
      %p263 = scmp.eq.s32.totalorder %s31, 1
      %p264 = por %p262, %p263
      %p266 = scmp.ne.s32.totalorder %s251, %s265
      %p267 = scmp.eq.s32.totalorder %s31, 0
      %p268 = por %p266, %p267
      %s270 = sadd.s32 %s269, 1
      %p273 = scmp.eq.s32.totalorder %s25, 1
      %p274 = scmp.ne.s32.totalorder %s269, %s271
      %p275 = scmp.eq.s32.totalorder %s25, 0
      %p276 = por %p274, %p275
      %p277 = scmp.ne.s32.totalorder %s269, %s271
      %p278 = scmp.eq.s32.totalorder %s30, 1
      %p279 = por %p277, %p278
      %p280 = scmp.ne.s32.totalorder %s271, %s272
      %p281 = scmp.eq.s32.totalorder %s30, 0
      %p282 = por %p280, %p281
      %p283 = scmp.ne.s32.totalorder %s271, %s272
      %p284 = scmp.eq.s32.totalorder %s31, 1
      %p285 = por %p283, %p284
      %p287 = scmp.ne.s32.totalorder %s272, %s286
      %p288 = scmp.eq.s32.totalorder %s31, 0
      %p289 = por %p287, %p288
      %s291 = sadd.s32 %s290, 1
      %p294 = scmp.eq.s32.totalorder %s25, 1
      %p295 = scmp.ne.s32.totalorder %s290, %s292
      %p296 = scmp.eq.s32.totalorder %s25, 0
      %p297 = por %p295, %p296
      %p298 = scmp.ne.s32.totalorder %s290, %s292
      %p299 = scmp.eq.s32.totalorder %s30, 1
      %p300 = por %p298, %p299
      %p301 = scmp.ne.s32.totalorder %s292, %s293
      %p302 = scmp.eq.s32.totalorder %s30, 0
      %p303 = por %p301, %p302
      %p304 = scmp.ne.s32.totalorder %s292, %s293
      %p305 = scmp.eq.s32.totalorder %s31, 1
      %p306 = por %p304, %p305
      %p308 = scmp.ne.s32.totalorder %s293, %s307
      %p309 = scmp.eq.s32.totalorder %s31, 0
      %p310 = por %p308, %p309
      %s312 = sadd.s32 %s311, 1
      %p315 = scmp.eq.s32.totalorder %s25, 1
      %p316 = scmp.ne.s32.totalorder %s311, %s313
      %p317 = scmp.eq.s32.totalorder %s25, 0
      %p318 = por %p316, %p317
      %p319 = scmp.ne.s32.totalorder %s311, %s313
      %p320 = scmp.eq.s32.totalorder %s30, 1
      %p321 = por %p319, %p320
      %p322 = scmp.ne.s32.totalorder %s313, %s314
      %p323 = scmp.eq.s32.totalorder %s30, 0
      %p324 = por %p322, %p323
      %p325 = scmp.ne.s32.totalorder %s313, %s314
      %p326 = scmp.eq.s32.totalorder %s31, 1
      %p327 = por %p325, %p326
      %p329 = scmp.ne.s32.totalorder %s314, %s328
      %p330 = scmp.eq.s32.totalorder %s31, 0
      %p331 = por %p329, %p330
      %s333 = sadd.s32 %s332, 1
      %p336 = scmp.eq.s32.totalorder %s25, 1
      %p337 = scmp.ne.s32.totalorder %s332, %s334
      %p338 = scmp.eq.s32.totalorder %s25, 0
      %p339 = por %p337, %p338
      %p340 = scmp.ne.s32.totalorder %s332, %s334
      %p341 = scmp.eq.s32.totalorder %s30, 1
      %p342 = por %p340, %p341
      %p343 = scmp.ne.s32.totalorder %s334, %s335
      %p344 = scmp.eq.s32.totalorder %s30, 0
      %p345 = por %p343, %p344
      %p346 = scmp.ne.s32.totalorder %s334, %s335
      %p347 = scmp.eq.s32.totalorder %s31, 1
      %p348 = por %p346, %p347
      %p350 = scmp.ne.s32.totalorder %s335, %s349
      %p351 = scmp.eq.s32.totalorder %s31, 0
      %p352 = por %p350, %p351
      %s354 = sadd.s32 %s353, 1
      %p357 = scmp.eq.s32.totalorder %s25, 1
      %p358 = scmp.ne.s32.totalorder %s353, %s355
      %p359 = scmp.eq.s32.totalorder %s25, 0
      %p360 = por %p358, %p359
      %p361 = scmp.ne.s32.totalorder %s353, %s355
      %p362 = scmp.eq.s32.totalorder %s30, 1
      %p363 = por %p361, %p362
      %p364 = scmp.ne.s32.totalorder %s355, %s356
      %p365 = scmp.eq.s32.totalorder %s30, 0
      %p366 = por %p364, %p365
      %p367 = scmp.ne.s32.totalorder %s355, %s356
      %p368 = scmp.eq.s32.totalorder %s31, 1
      %p369 = por %p367, %p368
      %p371 = scmp.ne.s32.totalorder %s356, %s370
      %p372 = scmp.eq.s32.totalorder %s31, 0
      %p373 = por %p371, %p372
      %s374 = ssub.s32 %s25, %s32
      %p375 = scmp.eq.s32.totalorder %s374, 0
      %s377 = sadd.s32 %s376, 1
      %s378 = scalar_select %p375, %s376, %s377
      %p381 = pneg %p375
      %p382 = scmp.eq.s32.totalorder %s25, 1
      %p383 = por %p381, %p382
      %p384 = scmp.ne.s32.totalorder %s376, %s379
      %p385 = scmp.eq.s32.totalorder %s25, 0
      %p386 = por %p384, %p385
      %p387 = scmp.ne.s32.totalorder %s376, %s379
      %p388 = scmp.eq.s32.totalorder %s30, 1
      %p389 = por %p387, %p388
      %p390 = scmp.ne.s32.totalorder %s379, %s380
      %p391 = scmp.eq.s32.totalorder %s30, 0
      %p392 = por %p390, %p391
      %p393 = scmp.ne.s32.totalorder %s379, %s380
      %p394 = scmp.eq.s32.totalorder %s31, 1
      %p395 = por %p393, %p394
      %p397 = scmp.ne.s32.totalorder %s380, %s396
      %p398 = scmp.eq.s32.totalorder %s31, 0
      %p399 = por %p397, %p398
      %p400 = scmp.le.s32.totalorder 1, %s25
      %p401 = scmp.lt.s32.totalorder %s25, 3
      %p402 = pnand %p400, %p401
      %p403 = pneg %p402
      // Predicated region
      $region9: #{convmixer_forward.1} parent=5 // pred_check
        _
      $region10: #{convmixer_forward.1} parent=5 // pred_check_branch
        %405 = sbr.rel (%p402) target = $region12
      $region11: #{convmixer_forward.1} parent=5 // pred_region
        %s406 = ssub.s32 %s25, 1
        // Predicated region
        $region13: #{convmixer_forward.1} parent=11 // pred_check
          %p407 = pneg %p72
        $region14: #{convmixer_forward.1} parent=11 // pred_check_branch
          %409 = sbr.rel (%p407) target = $region16
        $region15: #{convmixer_forward.1} parent=11 // pred_region
          _
        $region16: #{convmixer_forward.1} parent=11 // pred_fallthru
          _
        // Predicated region
        $region17: #{convmixer_forward.1} parent=11 // pred_check
          %p410 = pneg %p93
        $region18: #{convmixer_forward.1} parent=11 // pred_check_branch
          %412 = sbr.rel (%p410) target = $region20
        $region19: #{convmixer_forward.1} parent=11 // pred_region
          _
        $region20: #{convmixer_forward.1} parent=11 // pred_fallthru
          _
        // Predicated region
        $region21: #{convmixer_forward.1} parent=11 // pred_check
          %p413 = pneg %p114
        $region22: #{convmixer_forward.1} parent=11 // pred_check_branch
          %415 = sbr.rel (%p413) target = $region24
        $region23: #{convmixer_forward.1} parent=11 // pred_region
          _
        $region24: #{convmixer_forward.1} parent=11 // pred_fallthru
          _
        // Predicated region
        $region25: #{convmixer_forward.1} parent=11 // pred_check
          %p416 = pneg %p135
        $region26: #{convmixer_forward.1} parent=11 // pred_check_branch
          %418 = sbr.rel (%p416) target = $region28
        $region27: #{convmixer_forward.1} parent=11 // pred_region
          _
        $region28: #{convmixer_forward.1} parent=11 // pred_fallthru
          _
        // Predicated region
        $region29: #{convmixer_forward.1} parent=11 // pred_check
          %p419 = pneg %p156
        $region30: #{convmixer_forward.1} parent=11 // pred_check_branch
          %421 = sbr.rel (%p419) target = $region32
        $region31: #{convmixer_forward.1} parent=11 // pred_region
          _
        $region32: #{convmixer_forward.1} parent=11 // pred_fallthru
          _
        // Predicated region
        $region33: #{convmixer_forward.1} parent=11 // pred_check
          %p422 = pneg %p177
        $region34: #{convmixer_forward.1} parent=11 // pred_check_branch
          %424 = sbr.rel (%p422) target = $region36
        $region35: #{convmixer_forward.1} parent=11 // pred_region
          _
        $region36: #{convmixer_forward.1} parent=11 // pred_fallthru
          _
        // Predicated region
        $region37: #{convmixer_forward.1} parent=11 // pred_check
          %p425 = pneg %p198
        $region38: #{convmixer_forward.1} parent=11 // pred_check_branch
          %427 = sbr.rel (%p425) target = $region40
        $region39: #{convmixer_forward.1} parent=11 // pred_region
          _
        $region40: #{convmixer_forward.1} parent=11 // pred_fallthru
          _
        // Predicated region
        $region41: #{convmixer_forward.1} parent=11 // pred_check
          %p428 = pneg %p219
        $region42: #{convmixer_forward.1} parent=11 // pred_check_branch
          %430 = sbr.rel (%p428) target = $region44
        $region43: #{convmixer_forward.1} parent=11 // pred_region
          _
        $region44: #{convmixer_forward.1} parent=11 // pred_fallthru
          _
        // Predicated region
        $region45: #{convmixer_forward.1} parent=11 // pred_check
          %p431 = pneg %p240
        $region46: #{convmixer_forward.1} parent=11 // pred_check_branch
          %433 = sbr.rel (%p431) target = $region48
        $region47: #{convmixer_forward.1} parent=11 // pred_region
          _
        $region48: #{convmixer_forward.1} parent=11 // pred_fallthru
          _
        // Predicated region
        $region49: #{convmixer_forward.1} parent=11 // pred_check
          %p434 = pneg %p261
        $region50: #{convmixer_forward.1} parent=11 // pred_check_branch
          %436 = sbr.rel (%p434) target = $region52
        $region51: #{convmixer_forward.1} parent=11 // pred_region
          _
        $region52: #{convmixer_forward.1} parent=11 // pred_fallthru
          _
        // Predicated region
        $region53: #{convmixer_forward.1} parent=11 // pred_check
          %p437 = pneg %p282
        $region54: #{convmixer_forward.1} parent=11 // pred_check_branch
          %439 = sbr.rel (%p437) target = $region56
        $region55: #{convmixer_forward.1} parent=11 // pred_region
          _
        $region56: #{convmixer_forward.1} parent=11 // pred_fallthru
          _
        // Predicated region
        $region57: #{convmixer_forward.1} parent=11 // pred_check
          %p440 = pneg %p303
        $region58: #{convmixer_forward.1} parent=11 // pred_check_branch
          %442 = sbr.rel (%p440) target = $region60
        $region59: #{convmixer_forward.1} parent=11 // pred_region
          _
        $region60: #{convmixer_forward.1} parent=11 // pred_fallthru
          _
        // Predicated region
        $region61: #{convmixer_forward.1} parent=11 // pred_check
          %p443 = pneg %p324
        $region62: #{convmixer_forward.1} parent=11 // pred_check_branch
          %445 = sbr.rel (%p443) target = $region64
        $region63: #{convmixer_forward.1} parent=11 // pred_region
          _
        $region64: #{convmixer_forward.1} parent=11 // pred_fallthru
          _
        // Predicated region
        $region65: #{convmixer_forward.1} parent=11 // pred_check
          %p446 = pneg %p345
        $region66: #{convmixer_forward.1} parent=11 // pred_check_branch
          %448 = sbr.rel (%p446) target = $region68
        $region67: #{convmixer_forward.1} parent=11 // pred_region
          _
        $region68: #{convmixer_forward.1} parent=11 // pred_fallthru
          _
        // Predicated region
        $region69: #{convmixer_forward.1} parent=11 // pred_check
          %p449 = pneg %p366
        $region70: #{convmixer_forward.1} parent=11 // pred_check_branch
          %451 = sbr.rel (%p449) target = $region72
        $region71: #{convmixer_forward.1} parent=11 // pred_region
          _
        $region72: #{convmixer_forward.1} parent=11 // pred_fallthru
          _
      $region12: #{convmixer_forward.1} parent=5 // pred_fallthru
        _
      %p452 = scmp.lt.s32.totalorder %s25, 2
      // Predicated region
      $region73: #{convmixer_forward.1} parent=5 // pred_check
        %p453 = pneg %p452
      $region74: #{convmixer_forward.1} parent=5 // pred_check_branch
        %455 = sbr.rel (%p453) target = $region76
      $region75: #{convmixer_forward.1} parent=5 // pred_region
        // Predicated region
        $region77: #{convmixer_forward.1} parent=75 // pred_check
          %p456 = pneg %p45
        $region78: #{convmixer_forward.1} parent=75 // pred_check_branch
          %458 = sbr.rel (%p456) target = $region80
        $region79: #{convmixer_forward.1} parent=75 // pred_region
          %p459 = scmp.lt.s32.totalorder %s25, 1
          %s460 = scalar_select %p459, %s25, 1
          %s461 = smul.addr %s460, 2
          %s462 = smul.addr %s461, 8
          %s463 = scalar_lea.vmem %s0, %s462
        $region80: #{convmixer_forward.1} parent=75 // pred_fallthru
          _
      $region76: #{convmixer_forward.1} parent=5 // pred_fallthru
        _
      %p464 = scmp.le.s32.totalorder 1, %s25
      %p465 = scmp.lt.s32.totalorder %s25, 3
      %p466 = pnand %p464, %p465
      %p467 = pneg %p466
      // Predicated region
      $region81: #{convmixer_forward.1} parent=5 // pred_check
        _
      $region82: #{convmixer_forward.1} parent=5 // pred_check_branch
        %469 = sbr.rel (%p466) target = $region84
      $region83: #{convmixer_forward.1} parent=5 // pred_region
        %s470 = ssub.s32 %s25, 1
        %p471 = scmp.lt.s32.totalorder %s30, 1
        %s472 = scalar_select %p471, %s30, 1
        %s473 = smul.addr %s472, 2
        %s474 = smul.addr %s473, 8
        %s475 = scalar_lea.vmem %s0, %s474
        %p476 = pneg %p51
        %p477 = pneg %p48
        %p478 = pneg %p72
        %p479 = pneg %p69
        %p480 = pneg %p93
        %p481 = pneg %p90
        %p482 = pneg %p114
        %p483 = pneg %p111
        %p484 = pneg %p135
        %p485 = pneg %p132
        %p486 = pneg %p156
        %p487 = pneg %p153
        %p488 = pneg %p177
        %p489 = pneg %p174
        %p490 = pneg %p198
        %p491 = pneg %p195
        %p492 = pneg %p219
        %p493 = pneg %p216
        %p494 = pneg %p240
        %p495 = pneg %p237
        %p496 = pneg %p261
        %p497 = pneg %p258
        %p498 = pneg %p282
        %p499 = pneg %p279
        %p500 = pneg %p303
        %p501 = pneg %p300
        %p502 = pneg %p324
        %p503 = pneg %p321
        %p504 = pneg %p345
        %p505 = pneg %p342
        %p506 = pneg %p366
        %p507 = pneg %p363
        %p508 = pneg %p392
        %p509 = pneg %p389
        %s510 = sand.u32 %s379, 1
        %s511 = scalar_lea.sflag [#allocation3], %s510
        %s512 = sand.u32 %s379, 1
        %s513 = scalar_lea.vmem [#allocation2], %s512
        %p514 = scmp.lt.s32.totalorder %s30, 1
        %s515 = scalar_select %p514, %s30, 1
        %s516 = smul.addr %s515, 2
        %s517 = smul.addr %s516, 8
        %s518 = scalar_lea.vmem %s0, %s517
        %v519 = vld [vmem:[%s518] sm:$0xff]
        %v520 = vld [vmem:[%s518 + $0x8] sm:$0xff]
        %v521 = vld [vmem:[%s2] sm:$0xff]
        %v522 = vld [vmem:[%s2 + $0x8] sm:$0xff]
        %v523 = vld [vmem:[%s2 + $0x10] sm:$0xff]
        %v524 = vld [vmem:[%s2 + $0x18] sm:$0xff]
        %v525 = vld [vmem:[%s2 + $0x20] sm:$0xff]
        %v526 = vld [vmem:[%s2 + $0x28] sm:$0xff]
        %v527 = vld [vmem:[%s4] sm:$0x1]
        %v528 = vld [vmem:[%s3] sm:$0x1]
        %v530 = vlaneseq
        %v531 = vshrl.u32 %v530, 7
        %v532 = vsub.s32 0, %v531
        %v533 = vrot.slane %v528, %v532
        %vm535 = vcmask 392192
        %v537 = vsel %vm535, %v519, 0
        %v540 = vsel %vm535, %v520, 0
        %542 = vmatprep.subr.mxu0 0.0
        %543 = vmatpush1.msra.mxu0 %v521
        %544 = vmatprep.subr.mxu0 0.0
        %545 = vmatpush1.msra.mxu0 %v522
        %546 = vmatprep.subr.mxu0 0.0
        %547 = vmatpush1.msra.mxu0 %v523
        %548 = vmatprep.subr.mxu0 0.0
        %549 = vmatpush1.msra.mxu0 %v524
        %550 = vmatprep.subr.mxu0 0.0
        %551 = vmatpush1.msra.mxu0 %v525
        %552 = vmatprep.subr.mxu0 0.0
        %553 = vmatpush1.msra.mxu0 %v526
        %554 = vmatprep.subr.mxu0 0.0
        %555 = vmatpush1.msra.mxu0 0.0
        %556 = vmatprep.subr.mxu0 0.0
        %557 = vmatpush1.msra.mxu0 0.0
        %558 = vmatprep.subr.mxu0 0.0
        %559 = vmatpush1.msra.mxu0 0.0
        %560 = vmatprep.subr.mxu0 0.0
        %561 = vmatpush1.msra.mxu0 0.0
        %562 = vmatprep.subr.mxu0 0.0
        %563 = vmatpush1.msra.mxu0 0.0
        %564 = vmatprep.subr.mxu0 0.0
        %565 = vmatpush1.msra.mxu0 0.0
        %566 = vmatprep.subr.mxu0 0.0
        %567 = vmatpush1.msra.mxu0 0.0
        %568 = vmatprep.subr.mxu0 0.0
        %569 = vmatpush1.msra.mxu0 0.0
        %570 = vmatprep.subr.mxu0 0.0
        %571 = vmatpush1.msra.mxu0 0.0
        %572 = vmatprep.subr.mxu0 0.0
        %573 = vmatpush1.msra.mxu0 0.0
        %574 = vmatprep.subr.mxu0 0.0
        %575 = vmatpush1.msra.mxu0 0.0
        %576 = vmatprep.subr.mxu0 0.0
        %577 = vmatpush1.msra.mxu0 0.0
        %578 = vmatprep.subr.mxu0 0.0
        %579 = vmatpush1.msra.mxu0 0.0
        %580 = vmatprep.subr.mxu0 0.0
        %581 = vmatpush1.msra.mxu0 0.0
        %582 = vmatprep.subr.mxu0 0.0
        %583 = vmatpush1.msra.mxu0 0.0
        %584 = vmatprep.subr.mxu0 0.0
        %585 = vmatpush1.msra.mxu0 0.0
        %586 = vmatprep.subr.mxu0 0.0
        %587 = vmatpush1.msra.mxu0 0.0
        %588 = vmatprep.subr.mxu0 0.0
        %589 = vmatpush1.msra.mxu0 0.0
        %590 = vmatprep.subr.mxu0 0.0
        %591 = vmatpush1.msra.mxu0 0.0
        %592 = vmatprep.subr.mxu0 0.0
        %593 = vmatpush1.msra.mxu0 0.0
        %594 = vmatprep.subr.mxu0 0.0
        %595 = vmatpush1.msra.mxu0 0.0
        %596 = vmatprep.subr.mxu0 0.0
        %597 = vmatpush1.msra.mxu0 0.0
        %598 = vmatprep.subr.mxu0 0.0
        %599 = vmatpush1.msra.mxu0 0.0
        %600 = vmatprep.subr.mxu0 0.0
        %601 = vmatpush1.msra.mxu0 0.0
        %602 = vmatprep.subr.mxu0 0.0
        %603 = vmatpush1.msra.mxu0 0.0
        %604 = vmatprep.subr.mxu0 0.0
        %605 = vmatpush1.msra.mxu0 0.0
        %606 = vmatprep.mubr.f32.mxu0 0.0
        %607 = vmatmul.mubr.f32.gmra.mrb[0].mxu0 %v537
        %v608 = vpop.f32.mrb[0].mxu0
        %v609 = vadd.f32 %v533, %v608
        %v610 = vpop.f32.mrb[0].mxu0
        %611 = vmatprep.mubr.f32.mxu0 0.0
        %612 = vmatmul.mubr.f32.gmra.mrb[0].mxu0 %v540
        %v613 = vpop.f32.mrb[0].mxu0
        %v614 = vadd.f32 %v533, %v613
        %v615 = vpop.f32.mrb[0].mxu0
        %616 = vdwg.mxu0
        %v617 = vmul.f32 %v609, 0.5
        %v618 = vmul.f32 %v614, 0.5
        %v619 = vmul.f32 %v609, 0.70710677
        %v620 = vmul.f32 %v614, 0.70710677
        %v621 = verf.f32.pop %v619
        %v622 = verf.f32.pop %v620
        %v623 = vadd.f32 %v621, 1.0
        %v624 = vadd.f32 %v622, 1.0
        %v625 = vmul.f32 %v617, %v623
        %v626 = vmul.f32 %v618, %v624
        %v628 = vlaneseq
        %v629 = vshrl.u32 %v628, 7
        %v630 = vsub.s32 0, %v629
        %v631 = vrot.slane %v527, %v630
        %v633 = vmul.f32 %v631, %v625
        %v634 = vmul.f32 %v631, %v626
        %v635 = vld [vmem:[%s5] sm:$0x1]
        %v637 = vlaneseq
        %v638 = vshrl.u32 %v637, 7
        %v639 = vsub.s32 0, %v638
        %v640 = vrot.slane %v635, %v639
        %v642 = vadd.f32 %v633, %v640
        %v643 = vadd.f32 %v634, %v640
        %v644 = vld [vmem:[%s1] sm:$0xff]
        %v645 = vld [vmem:[%s1 + $0x8] sm:$0xff]
        %v646 = vld [vmem:[%s1 + $0x10] sm:$0xff]
        %v647 = vld [vmem:[%s1 + $0x18] sm:$0xff]
        %v648 = vld [vmem:[%s1 + $0x20] sm:$0xff]
        %v649 = vld [vmem:[%s1 + $0x28] sm:$0xff]
        %v650 = vld [vmem:[%s1 + $0x30] sm:$0xff]
        %v651 = vld [vmem:[%s1 + $0x38] sm:$0xff]
        %v652 = vld [vmem:[%s1 + $0x40] sm:$0xff]
        %v653 = vld [vmem:[%s1 + $0x48] sm:$0xff]
        %v654 = vld [vmem:[%s1 + $0x50] sm:$0xff]
        %v655 = vld [vmem:[%s1 + $0x58] sm:$0xff]
        %v656 = vld [vmem:[%s1 + $0x60] sm:$0xff]
        %v657 = vld [vmem:[%s1 + $0x68] sm:$0xff]
        %v658 = vld [vmem:[%s1 + $0x70] sm:$0xff]
        %v659 = vld [vmem:[%s1 + $0x78] sm:$0xff]
        %v660 = vld [vmem:[%s1 + $0x80] sm:$0xff]
        %v661 = vld [vmem:[%s1 + $0x88] sm:$0xff]
        %vm662 = vcmask 130048
        %v664 = vsel %vm662, %v644, 0
        %v667 = vsel %vm662, %v645, 0
        %v670 = vsel %vm662, %v646, 0
        %v673 = vsel %vm662, %v647, 0
        %v676 = vsel %vm662, %v648, 0
        %v679 = vsel %vm662, %v649, 0
        %v682 = vsel %vm662, %v650, 0
        %v685 = vsel %vm662, %v651, 0
        %v688 = vsel %vm662, %v652, 0
        %v691 = vsel %vm662, %v653, 0
        %v694 = vsel %vm662, %v654, 0
        %v697 = vsel %vm662, %v655, 0
        %v700 = vsel %vm662, %v656, 0
        %v703 = vsel %vm662, %v657, 0
        %v706 = vsel %vm662, %v658, 0
        %v709 = vsel %vm662, %v659, 0
        %v712 = vsel %vm662, %v660, 0
        %v715 = vsel %vm662, %v661, 0
        %717 = vmatprep.subr.mxu0 0.0
        %718 = vmatpush1.msra.mxu0 %v642
        %719 = vmatprep.subr.mxu0 0.0
        %720 = vmatpush1.msra.mxu0 %v643
        %721 = vmatprep.subr.mxu0 0.0
        %722 = vmatpush1.msra.mxu0 0.0
        %723 = vmatprep.subr.mxu0 0.0
        %724 = vmatpush1.msra.mxu0 0.0
        %725 = vmatprep.subr.mxu0 0.0
        %726 = vmatpush1.msra.mxu0 0.0
        %727 = vmatprep.subr.mxu0 0.0
        %728 = vmatpush1.msra.mxu0 0.0
        %729 = vmatprep.subr.mxu0 0.0
        %730 = vmatpush1.msra.mxu0 0.0
        %731 = vmatprep.subr.mxu0 0.0
        %732 = vmatpush1.msra.mxu0 0.0
        %733 = vmatprep.subr.mxu0 0.0
        %734 = vmatpush1.msra.mxu0 0.0
        %735 = vmatprep.subr.mxu0 0.0
        %736 = vmatpush1.msra.mxu0 0.0
        %737 = vmatprep.subr.mxu0 0.0
        %738 = vmatpush1.msra.mxu0 0.0
        %739 = vmatprep.subr.mxu0 0.0
        %740 = vmatpush1.msra.mxu0 0.0
        %741 = vmatprep.subr.mxu0 0.0
        %742 = vmatpush1.msra.mxu0 0.0
        %743 = vmatprep.subr.mxu0 0.0
        %744 = vmatpush1.msra.mxu0 0.0
        %745 = vmatprep.subr.mxu0 0.0
        %746 = vmatpush1.msra.mxu0 0.0
        %747 = vmatprep.subr.mxu0 0.0
        %748 = vmatpush1.msra.mxu0 0.0
        %749 = vmatprep.subr.mxu0 0.0
        %750 = vmatpush1.msra.mxu0 0.0
        %751 = vmatprep.subr.mxu0 0.0
        %752 = vmatpush1.msra.mxu0 0.0
        %753 = vmatprep.subr.mxu0 0.0
        %754 = vmatpush1.msra.mxu0 0.0
        %755 = vmatprep.subr.mxu0 0.0
        %756 = vmatpush1.msra.mxu0 0.0
        %757 = vmatprep.subr.mxu0 0.0
        %758 = vmatpush1.msra.mxu0 0.0
        %759 = vmatprep.subr.mxu0 0.0
        %760 = vmatpush1.msra.mxu0 0.0
        %761 = vmatprep.subr.mxu0 0.0
        %762 = vmatpush1.msra.mxu0 0.0
        %763 = vmatprep.subr.mxu0 0.0
        %764 = vmatpush1.msra.mxu0 0.0
        %765 = vmatprep.subr.mxu0 0.0
        %766 = vmatpush1.msra.mxu0 0.0
        %767 = vmatprep.subr.mxu0 0.0
        %768 = vmatpush1.msra.mxu0 0.0
        %769 = vmatprep.subr.mxu0 0.0
        %770 = vmatpush1.msra.mxu0 0.0
        %771 = vmatprep.subr.mxu0 0.0
        %772 = vmatpush1.msra.mxu0 0.0
        %773 = vmatprep.subr.mxu0 0.0
        %774 = vmatpush1.msra.mxu0 0.0
        %775 = vmatprep.subr.mxu0 0.0
        %776 = vmatpush1.msra.mxu0 0.0
        %777 = vmatprep.subr.mxu0 0.0
        %778 = vmatpush1.msra.mxu0 0.0
        %779 = vmatprep.subr.mxu0 0.0
        %780 = vmatpush1.msra.mxu0 0.0
        %781 = vmatprep.mubr.f32.mxu0 0.0
        %782 = vmatmul.mubr.f32.gmra.mrb[0].mxu0 %v664
        %v783 = vpop.f32.mrb[0].mxu0
        %v784 = vadd.f32 0.0, %v783
        %v785 = vpop.f32.mrb[0].mxu0
        %786 = vmatprep.mubr.f32.mxu0 0.0
        %787 = vmatmul.mubr.f32.gmra.mrb[0].mxu0 %v667
        %v788 = vpop.f32.mrb[0].mxu0
        %v789 = vadd.f32 0.0, %v788
        %v790 = vpop.f32.mrb[0].mxu0
        %791 = vmatprep.mubr.f32.mxu0 0.0
        %792 = vmatmul.mubr.f32.gmra.mrb[0].mxu0 %v670
        %v793 = vpop.f32.mrb[0].mxu0
        %v794 = vadd.f32 0.0, %v793
        %v795 = vpop.f32.mrb[0].mxu0
        %796 = vmatprep.mubr.f32.mxu0 0.0
        %797 = vmatmul.mubr.f32.gmra.mrb[0].mxu0 %v673
        %v798 = vpop.f32.mrb[0].mxu0
        %v799 = vadd.f32 0.0, %v798
        %v800 = vpop.f32.mrb[0].mxu0
        %801 = vmatprep.mubr.f32.mxu0 0.0
        %802 = vmatmul.mubr.f32.gmra.mrb[0].mxu0 %v676
        %v803 = vpop.f32.mrb[0].mxu0
        %v804 = vadd.f32 0.0, %v803
        %v805 = vpop.f32.mrb[0].mxu0
        %806 = vmatprep.mubr.f32.mxu0 0.0
        %807 = vmatmul.mubr.f32.gmra.mrb[0].mxu0 %v679
        %v808 = vpop.f32.mrb[0].mxu0
        %v809 = vadd.f32 0.0, %v808
        %v810 = vpop.f32.mrb[0].mxu0
        %811 = vmatprep.mubr.f32.mxu0 0.0
        %812 = vmatmul.mubr.f32.gmra.mrb[0].mxu0 %v682
        %v813 = vpop.f32.mrb[0].mxu0
        %v814 = vadd.f32 0.0, %v813
        %v815 = vpop.f32.mrb[0].mxu0
        %816 = vmatprep.mubr.f32.mxu0 0.0
        %817 = vmatmul.mubr.f32.gmra.mrb[0].mxu0 %v685
        %v818 = vpop.f32.mrb[0].mxu0
        %v819 = vadd.f32 0.0, %v818
        %v820 = vpop.f32.mrb[0].mxu0
        %821 = vmatprep.mubr.f32.mxu0 0.0
        %822 = vmatmul.mubr.f32.gmra.mrb[0].mxu0 %v688
        %v823 = vpop.f32.mrb[0].mxu0
        %v824 = vadd.f32 0.0, %v823
        %v825 = vpop.f32.mrb[0].mxu0
        %826 = vmatprep.mubr.f32.mxu0 0.0
        %827 = vmatmul.mubr.f32.gmra.mrb[0].mxu0 %v691
        %v828 = vpop.f32.mrb[0].mxu0
        %v829 = vadd.f32 0.0, %v828
        %v830 = vpop.f32.mrb[0].mxu0
        %831 = vmatprep.mubr.f32.mxu0 0.0
        %832 = vmatmul.mubr.f32.gmra.mrb[0].mxu0 %v694
        %v833 = vpop.f32.mrb[0].mxu0
        %v834 = vadd.f32 0.0, %v833
        %v835 = vpop.f32.mrb[0].mxu0
        %836 = vmatprep.mubr.f32.mxu0 0.0
        %837 = vmatmul.mubr.f32.gmra.mrb[0].mxu0 %v697
        %v838 = vpop.f32.mrb[0].mxu0
        %v839 = vadd.f32 0.0, %v838
        %v840 = vpop.f32.mrb[0].mxu0
        %841 = vmatprep.mubr.f32.mxu0 0.0
        %842 = vmatmul.mubr.f32.gmra.mrb[0].mxu0 %v700
        %v843 = vpop.f32.mrb[0].mxu0
        %v844 = vadd.f32 0.0, %v843
        %v845 = vpop.f32.mrb[0].mxu0
        %846 = vmatprep.mubr.f32.mxu0 0.0
        %847 = vmatmul.mubr.f32.gmra.mrb[0].mxu0 %v703
        %v848 = vpop.f32.mrb[0].mxu0
        %v849 = vadd.f32 0.0, %v848
        %v850 = vpop.f32.mrb[0].mxu0
        %851 = vmatprep.mubr.f32.mxu0 0.0
        %852 = vmatmul.mubr.f32.gmra.mrb[0].mxu0 %v706
        %v853 = vpop.f32.mrb[0].mxu0
        %v854 = vadd.f32 0.0, %v853
        %v855 = vpop.f32.mrb[0].mxu0
        %856 = vmatprep.mubr.f32.mxu0 0.0
        %857 = vmatmul.mubr.f32.gmra.mrb[0].mxu0 %v709
        %v858 = vpop.f32.mrb[0].mxu0
        %v859 = vadd.f32 0.0, %v858
        %v860 = vpop.f32.mrb[0].mxu0
        %861 = vmatprep.mubr.f32.mxu0 0.0
        %862 = vmatmul.mubr.f32.gmra.mrb[0].mxu0 %v712
        %v863 = vpop.f32.mrb[0].mxu0
        %v864 = vadd.f32 0.0, %v863
        %v865 = vpop.f32.mrb[0].mxu0
        %866 = vmatprep.mubr.f32.mxu0 0.0
        %867 = vmatmul.mubr.f32.gmra.mrb[0].mxu0 %v715
        %v868 = vpop.f32.mrb[0].mxu0
        %v869 = vadd.f32 0.0, %v868
        %v870 = vpop.f32.mrb[0].mxu0
        %871 = vdwg.mxu0
        %v872 = vld [vmem:[%s6] sm:$0xff]
        %v873 = vld [vmem:[%s6 + $0x8] sm:$0x1]
        %v874 = vlaneseq
        %v875 = vshrl.u32 %v874, 7
        %v876 = vsub.s32 0, %v875
        %v877 = vrot.slane %v872, %v876
        %v878 = vmul.f32 %v784, %v877
        %v879 = vmul.f32 %v789, %v877
        %v880 = vlaneseq
        %v881 = vshrl.u32 %v880, 7
        %v882 = vsub.s32 1, %v881
        %v883 = vrot.slane %v872, %v882
        %v884 = vmul.f32 %v794, %v883
        %v885 = vmul.f32 %v799, %v883
        %v886 = vadd.f32 %v878, %v884
        %v887 = vadd.f32 %v879, %v885
        %v888 = vlaneseq
        %v889 = vshrl.u32 %v888, 7
        %v890 = vsub.s32 2, %v889
        %v891 = vrot.slane %v872, %v890
        %v892 = vmul.f32 %v804, %v891
        %v893 = vmul.f32 %v809, %v891
        %v894 = vadd.f32 %v886, %v892
        %v895 = vadd.f32 %v887, %v893
        %v896 = vlaneseq
        %v897 = vshrl.u32 %v896, 7
        %v898 = vsub.s32 3, %v897
        %v899 = vrot.slane %v872, %v898
        %v900 = vmul.f32 %v814, %v899
        %v901 = vmul.f32 %v819, %v899
        %v902 = vadd.f32 %v894, %v900
        %v903 = vadd.f32 %v895, %v901
        %v904 = vlaneseq
        %v905 = vshrl.u32 %v904, 7
        %v906 = vsub.s32 4, %v905
        %v907 = vrot.slane %v872, %v906
        %v908 = vmul.f32 %v824, %v907
        %v909 = vmul.f32 %v829, %v907
        %v910 = vadd.f32 %v902, %v908
        %v911 = vadd.f32 %v903, %v909
        %v912 = vlaneseq
        %v913 = vshrl.u32 %v912, 7
        %v914 = vsub.s32 5, %v913
        %v915 = vrot.slane %v872, %v914
        %v916 = vmul.f32 %v834, %v915
        %v917 = vmul.f32 %v839, %v915
        %v918 = vadd.f32 %v910, %v916
        %v919 = vadd.f32 %v911, %v917
        %v920 = vlaneseq
        %v921 = vshrl.u32 %v920, 7
        %v922 = vsub.s32 6, %v921
        %v923 = vrot.slane %v872, %v922
        %v924 = vmul.f32 %v844, %v923
        %v925 = vmul.f32 %v849, %v923
        %v926 = vadd.f32 %v918, %v924
        %v927 = vadd.f32 %v919, %v925
        %v928 = vlaneseq
        %v929 = vshrl.u32 %v928, 7
        %v930 = vsub.s32 7, %v929
        %v931 = vrot.slane %v872, %v930
        %v932 = vmul.f32 %v854, %v931
        %v933 = vmul.f32 %v859, %v931
        %v934 = vadd.f32 %v926, %v932
        %v935 = vadd.f32 %v927, %v933
        %v936 = vlaneseq
        %v937 = vshrl.u32 %v936, 7
        %v938 = vsub.s32 0, %v937
        %v939 = vrot.slane %v873, %v938
        %v940 = vmul.f32 %v864, %v939
        %v941 = vmul.f32 %v869, %v939
        %v942 = vadd.f32 %v934, %v940
        %v943 = vadd.f32 %v935, %v941
        %v944 = vld [vmem:[%s8] sm:$0x1]
        %v945 = vld [vmem:[%s7] sm:$0x1]
        %v947 = vlaneseq
        %v948 = vshrl.u32 %v947, 7
        %v949 = vsub.s32 0, %v948
        %v950 = vrot.slane %v945, %v949
        %v952 = vadd.f32 %v942, %v950
        %v953 = vadd.f32 %v943, %v950
        %v954 = vmul.f32 %v952, 0.5
        %v955 = vmul.f32 %v953, 0.5
        %v956 = vmul.f32 %v952, 0.70710677
        %v957 = vmul.f32 %v953, 0.70710677
        %v958 = verf.f32.pop %v956
        %v959 = verf.f32.pop %v957
        %v960 = vadd.f32 %v958, 1.0
        %v961 = vadd.f32 %v959, 1.0
        %v962 = vmul.f32 %v954, %v960
        %v963 = vmul.f32 %v955, %v961
        %v965 = vlaneseq
        %v966 = vshrl.u32 %v965, 7
        %v967 = vsub.s32 0, %v966
        %v968 = vrot.slane %v944, %v967
        %v970 = vmul.f32 %v968, %v962
        %v971 = vmul.f32 %v968, %v963
        %v972 = vld [vmem:[%s9] sm:$0x1]
        %v974 = vlaneseq
        %v975 = vshrl.u32 %v974, 7
        %v976 = vsub.s32 0, %v975
        %v977 = vrot.slane %v972, %v976
        %v979 = vadd.f32 %v970, %v977
        %v980 = vadd.f32 %v971, %v977
        %v981 = vadd.f32 %v979, %v642
        %v982 = vadd.f32 %v980, %v643
        %v983 = vld [vmem:[%s10] sm:$0xff]
        %v984 = vld [vmem:[%s10 + $0x8] sm:$0xff]
        %v985 = vld [vmem:[%s10 + $0x10] sm:$0xff]
        %v986 = vld [vmem:[%s10 + $0x18] sm:$0xff]
        %v987 = vld [vmem:[%s12] sm:$0x1]
        %v988 = vld [vmem:[%s11] sm:$0x1]
        %v990 = vlaneseq
        %v991 = vshrl.u32 %v990, 7
        %v992 = vsub.s32 0, %v991
        %v993 = vrot.slane %v988, %v992
        %vm995 = vcmask 261120
        %v997 = vsel %vm995, %v981, 0
        %v1000 = vsel %vm995, %v982, 0
        %1002 = vmatprep.subr.mxu0 0.0
        %1003 = vmatpush1.msra.mxu0 %v983
        %1004 = vmatprep.subr.mxu0 0.0
        %1005 = vmatpush1.msra.mxu0 %v984
        %1006 = vmatprep.subr.mxu0 0.0
        %1007 = vmatpush1.msra.mxu0 %v985
        %1008 = vmatprep.subr.mxu0 0.0
        %1009 = vmatpush1.msra.mxu0 %v986
        %1010 = vmatprep.subr.mxu0 0.0
        %1011 = vmatpush1.msra.mxu0 0.0
        %1012 = vmatprep.subr.mxu0 0.0
        %1013 = vmatpush1.msra.mxu0 0.0
        %1014 = vmatprep.subr.mxu0 0.0
        %1015 = vmatpush1.msra.mxu0 0.0
        %1016 = vmatprep.subr.mxu0 0.0
        %1017 = vmatpush1.msra.mxu0 0.0
        %1018 = vmatprep.subr.mxu0 0.0
        %1019 = vmatpush1.msra.mxu0 0.0
        %1020 = vmatprep.subr.mxu0 0.0
        %1021 = vmatpush1.msra.mxu0 0.0
        %1022 = vmatprep.subr.mxu0 0.0
        %1023 = vmatpush1.msra.mxu0 0.0
        %1024 = vmatprep.subr.mxu0 0.0
        %1025 = vmatpush1.msra.mxu0 0.0
        %1026 = vmatprep.subr.mxu0 0.0
        %1027 = vmatpush1.msra.mxu0 0.0
        %1028 = vmatprep.subr.mxu0 0.0
        %1029 = vmatpush1.msra.mxu0 0.0
        %1030 = vmatprep.subr.mxu0 0.0
        %1031 = vmatpush1.msra.mxu0 0.0
        %1032 = vmatprep.subr.mxu0 0.0
        %1033 = vmatpush1.msra.mxu0 0.0
        %1034 = vmatprep.subr.mxu0 0.0
        %1035 = vmatpush1.msra.mxu0 0.0
        %1036 = vmatprep.subr.mxu0 0.0
        %1037 = vmatpush1.msra.mxu0 0.0
        %1038 = vmatprep.subr.mxu0 0.0
        %1039 = vmatpush1.msra.mxu0 0.0
        %1040 = vmatprep.subr.mxu0 0.0
        %1041 = vmatpush1.msra.mxu0 0.0
        %1042 = vmatprep.subr.mxu0 0.0
        %1043 = vmatpush1.msra.mxu0 0.0
        %1044 = vmatprep.subr.mxu0 0.0
        %1045 = vmatpush1.msra.mxu0 0.0
        %1046 = vmatprep.subr.mxu0 0.0
        %1047 = vmatpush1.msra.mxu0 0.0
        %1048 = vmatprep.subr.mxu0 0.0
        %1049 = vmatpush1.msra.mxu0 0.0
        %1050 = vmatprep.subr.mxu0 0.0
        %1051 = vmatpush1.msra.mxu0 0.0
        %1052 = vmatprep.subr.mxu0 0.0
        %1053 = vmatpush1.msra.mxu0 0.0
        %1054 = vmatprep.subr.mxu0 0.0
        %1055 = vmatpush1.msra.mxu0 0.0
        %1056 = vmatprep.subr.mxu0 0.0
        %1057 = vmatpush1.msra.mxu0 0.0
        %1058 = vmatprep.subr.mxu0 0.0
        %1059 = vmatpush1.msra.mxu0 0.0
        %1060 = vmatprep.subr.mxu0 0.0
        %1061 = vmatpush1.msra.mxu0 0.0
        %1062 = vmatprep.subr.mxu0 0.0
        %1063 = vmatpush1.msra.mxu0 0.0
        %1064 = vmatprep.subr.mxu0 0.0
        %1065 = vmatpush1.msra.mxu0 0.0
        %1066 = vmatprep.mubr.f32.mxu0 0.0
        %1067 = vmatmul.mubr.f32.gmra.mrb[0].mxu0 %v997
        %v1068 = vpop.f32.mrb[0].mxu0
        %v1069 = vadd.f32 %v993, %v1068
        %v1070 = vpop.f32.mrb[0].mxu0
        %1071 = vmatprep.mubr.f32.mxu0 0.0
        %1072 = vmatmul.mubr.f32.gmra.mrb[0].mxu0 %v1000
        %v1073 = vpop.f32.mrb[0].mxu0
        %v1074 = vadd.f32 %v993, %v1073
        %v1075 = vpop.f32.mrb[0].mxu0
        %1076 = vdwg.mxu0
        %v1077 = vmul.f32 %v1069, 0.5
        %v1078 = vmul.f32 %v1074, 0.5
        %v1079 = vmul.f32 %v1069, 0.70710677
        %v1080 = vmul.f32 %v1074, 0.70710677
        %v1081 = verf.f32.pop %v1079
        %v1082 = verf.f32.pop %v1080
        %v1083 = vadd.f32 %v1081, 1.0
        %v1084 = vadd.f32 %v1082, 1.0
        %v1085 = vmul.f32 %v1077, %v1083
        %v1086 = vmul.f32 %v1078, %v1084
        %v1088 = vlaneseq
        %v1089 = vshrl.u32 %v1088, 7
        %v1090 = vsub.s32 0, %v1089
        %v1091 = vrot.slane %v987, %v1090
        %v1093 = vmul.f32 %v1091, %v1085
        %v1094 = vmul.f32 %v1091, %v1086
        %v1095 = vld [vmem:[%s13] sm:$0x1]
        %v1097 = vlaneseq
        %v1098 = vshrl.u32 %v1097, 7
        %v1099 = vsub.s32 0, %v1098
        %v1100 = vrot.slane %v1095, %v1099
        %v1102 = vadd.f32 %v1093, %v1100
        %v1103 = vadd.f32 %v1094, %v1100
        %1104 = vmatprep.subr.mxu0 0.0
        %1105 = vmatpush1.msra.mxu0 %v1102
        %1106 = vmatprep.subr.mxu0 0.0
        %1107 = vmatpush1.msra.mxu0 %v1103
        %1108 = vmatprep.subr.mxu0 0.0
        %1109 = vmatpush1.msra.mxu0 0.0
        %1110 = vmatprep.subr.mxu0 0.0
        %1111 = vmatpush1.msra.mxu0 0.0
        %1112 = vmatprep.subr.mxu0 0.0
        %1113 = vmatpush1.msra.mxu0 0.0
        %1114 = vmatprep.subr.mxu0 0.0
        %1115 = vmatpush1.msra.mxu0 0.0
        %1116 = vmatprep.subr.mxu0 0.0
        %1117 = vmatpush1.msra.mxu0 0.0
        %1118 = vmatprep.subr.mxu0 0.0
        %1119 = vmatpush1.msra.mxu0 0.0
        %1120 = vmatprep.subr.mxu0 0.0
        %1121 = vmatpush1.msra.mxu0 0.0
        %1122 = vmatprep.subr.mxu0 0.0
        %1123 = vmatpush1.msra.mxu0 0.0
        %1124 = vmatprep.subr.mxu0 0.0
        %1125 = vmatpush1.msra.mxu0 0.0
        %1126 = vmatprep.subr.mxu0 0.0
        %1127 = vmatpush1.msra.mxu0 0.0
        %1128 = vmatprep.subr.mxu0 0.0
        %1129 = vmatpush1.msra.mxu0 0.0
        %1130 = vmatprep.subr.mxu0 0.0
        %1131 = vmatpush1.msra.mxu0 0.0
        %1132 = vmatprep.subr.mxu0 0.0
        %1133 = vmatpush1.msra.mxu0 0.0
        %1134 = vmatprep.subr.mxu0 0.0
        %1135 = vmatpush1.msra.mxu0 0.0
        %1136 = vmatprep.subr.mxu0 0.0
        %1137 = vmatpush1.msra.mxu0 0.0
        %1138 = vmatprep.subr.mxu0 0.0
        %1139 = vmatpush1.msra.mxu0 0.0
        %1140 = vmatprep.subr.mxu0 0.0
        %1141 = vmatpush1.msra.mxu0 0.0
        %1142 = vmatprep.subr.mxu0 0.0
        %1143 = vmatpush1.msra.mxu0 0.0
        %1144 = vmatprep.subr.mxu0 0.0
        %1145 = vmatpush1.msra.mxu0 0.0
        %1146 = vmatprep.subr.mxu0 0.0
        %1147 = vmatpush1.msra.mxu0 0.0
        %1148 = vmatprep.subr.mxu0 0.0
        %1149 = vmatpush1.msra.mxu0 0.0
        %1150 = vmatprep.subr.mxu0 0.0
        %1151 = vmatpush1.msra.mxu0 0.0
        %1152 = vmatprep.subr.mxu0 0.0
        %1153 = vmatpush1.msra.mxu0 0.0
        %1154 = vmatprep.subr.mxu0 0.0
        %1155 = vmatpush1.msra.mxu0 0.0
        %1156 = vmatprep.subr.mxu0 0.0
        %1157 = vmatpush1.msra.mxu0 0.0
        %1158 = vmatprep.subr.mxu0 0.0
        %1159 = vmatpush1.msra.mxu0 0.0
        %1160 = vmatprep.subr.mxu0 0.0
        %1161 = vmatpush1.msra.mxu0 0.0
        %1162 = vmatprep.subr.mxu0 0.0
        %1163 = vmatpush1.msra.mxu0 0.0
        %1164 = vmatprep.subr.mxu0 0.0
        %1165 = vmatpush1.msra.mxu0 0.0
        %1166 = vmatprep.subr.mxu0 0.0
        %1167 = vmatpush1.msra.mxu0 0.0
        %1168 = vmatprep.mubr.f32.mxu0 0.0
        %1169 = vmatmul.mubr.f32.gmra.mrb[0].mxu0 %v664
        %v1170 = vpop.f32.mrb[0].mxu0
        %v1171 = vadd.f32 0.0, %v1170
        %v1172 = vpop.f32.mrb[0].mxu0
        %1173 = vmatprep.mubr.f32.mxu0 0.0
        %1174 = vmatmul.mubr.f32.gmra.mrb[0].mxu0 %v667
        %v1175 = vpop.f32.mrb[0].mxu0
        %v1176 = vadd.f32 0.0, %v1175
        %v1177 = vpop.f32.mrb[0].mxu0
        %1178 = vmatprep.mubr.f32.mxu0 0.0
        %1179 = vmatmul.mubr.f32.gmra.mrb[0].mxu0 %v670
        %v1180 = vpop.f32.mrb[0].mxu0
        %v1181 = vadd.f32 0.0, %v1180
        %v1182 = vpop.f32.mrb[0].mxu0
        %1183 = vmatprep.mubr.f32.mxu0 0.0
        %1184 = vmatmul.mubr.f32.gmra.mrb[0].mxu0 %v673
        %v1185 = vpop.f32.mrb[0].mxu0
        %v1186 = vadd.f32 0.0, %v1185
        %v1187 = vpop.f32.mrb[0].mxu0
        %1188 = vmatprep.mubr.f32.mxu0 0.0
        %1189 = vmatmul.mubr.f32.gmra.mrb[0].mxu0 %v676
        %v1190 = vpop.f32.mrb[0].mxu0
        %v1191 = vadd.f32 0.0, %v1190
        %v1192 = vpop.f32.mrb[0].mxu0
        %1193 = vmatprep.mubr.f32.mxu0 0.0
        %1194 = vmatmul.mubr.f32.gmra.mrb[0].mxu0 %v679
        %v1195 = vpop.f32.mrb[0].mxu0
        %v1196 = vadd.f32 0.0, %v1195
        %v1197 = vpop.f32.mrb[0].mxu0
        %1198 = vmatprep.mubr.f32.mxu0 0.0
        %1199 = vmatmul.mubr.f32.gmra.mrb[0].mxu0 %v682
        %v1200 = vpop.f32.mrb[0].mxu0
        %v1201 = vadd.f32 0.0, %v1200
        %v1202 = vpop.f32.mrb[0].mxu0
        %1203 = vmatprep.mubr.f32.mxu0 0.0
        %1204 = vmatmul.mubr.f32.gmra.mrb[0].mxu0 %v685
        %v1205 = vpop.f32.mrb[0].mxu0
        %v1206 = vadd.f32 0.0, %v1205
        %v1207 = vpop.f32.mrb[0].mxu0
        %1208 = vmatprep.mubr.f32.mxu0 0.0
        %1209 = vmatmul.mubr.f32.gmra.mrb[0].mxu0 %v688
        %v1210 = vpop.f32.mrb[0].mxu0
        %v1211 = vadd.f32 0.0, %v1210
        %v1212 = vpop.f32.mrb[0].mxu0
        %1213 = vmatprep.mubr.f32.mxu0 0.0
        %1214 = vmatmul.mubr.f32.gmra.mrb[0].mxu0 %v691
        %v1215 = vpop.f32.mrb[0].mxu0
        %v1216 = vadd.f32 0.0, %v1215
        %v1217 = vpop.f32.mrb[0].mxu0
        %1218 = vmatprep.mubr.f32.mxu0 0.0
        %1219 = vmatmul.mubr.f32.gmra.mrb[0].mxu0 %v694
        %v1220 = vpop.f32.mrb[0].mxu0
        %v1221 = vadd.f32 0.0, %v1220
        %v1222 = vpop.f32.mrb[0].mxu0
        %1223 = vmatprep.mubr.f32.mxu0 0.0
        %1224 = vmatmul.mubr.f32.gmra.mrb[0].mxu0 %v697
        %v1225 = vpop.f32.mrb[0].mxu0
        %v1226 = vadd.f32 0.0, %v1225
        %v1227 = vpop.f32.mrb[0].mxu0
        %1228 = vmatprep.mubr.f32.mxu0 0.0
        %1229 = vmatmul.mubr.f32.gmra.mrb[0].mxu0 %v700
        %v1230 = vpop.f32.mrb[0].mxu0
        %v1231 = vadd.f32 0.0, %v1230
        %v1232 = vpop.f32.mrb[0].mxu0
        %1233 = vmatprep.mubr.f32.mxu0 0.0
        %1234 = vmatmul.mubr.f32.gmra.mrb[0].mxu0 %v703
        %v1235 = vpop.f32.mrb[0].mxu0
        %v1236 = vadd.f32 0.0, %v1235
        %v1237 = vpop.f32.mrb[0].mxu0
        %1238 = vmatprep.mubr.f32.mxu0 0.0
        %1239 = vmatmul.mubr.f32.gmra.mrb[0].mxu0 %v706
        %v1240 = vpop.f32.mrb[0].mxu0
        %v1241 = vadd.f32 0.0, %v1240
        %v1242 = vpop.f32.mrb[0].mxu0
        %1243 = vmatprep.mubr.f32.mxu0 0.0
        %1244 = vmatmul.mubr.f32.gmra.mrb[0].mxu0 %v709
        %v1245 = vpop.f32.mrb[0].mxu0
        %v1246 = vadd.f32 0.0, %v1245
        %v1247 = vpop.f32.mrb[0].mxu0
        %1248 = vmatprep.mubr.f32.mxu0 0.0
        %1249 = vmatmul.mubr.f32.gmra.mrb[0].mxu0 %v712
        %v1250 = vpop.f32.mrb[0].mxu0
        %v1251 = vadd.f32 0.0, %v1250
        %v1252 = vpop.f32.mrb[0].mxu0
        %1253 = vmatprep.mubr.f32.mxu0 0.0
        %1254 = vmatmul.mubr.f32.gmra.mrb[0].mxu0 %v715
        %v1255 = vpop.f32.mrb[0].mxu0
        %v1256 = vadd.f32 0.0, %v1255
        %v1257 = vpop.f32.mrb[0].mxu0
        %1258 = vdwg.mxu0
        %s1259 = scalar_lea.vmem %s6, 16
        %v1260 = vld [vmem:[%s1259] sm:$0xff]
        %v1261 = vld [vmem:[%s1259 + $0x8] sm:$0x1]
        %v1262 = vlaneseq
        %v1263 = vshrl.u32 %v1262, 7
        %v1264 = vsub.s32 0, %v1263
        %v1265 = vrot.slane %v1260, %v1264
        %v1266 = vmul.f32 %v1171, %v1265
        %v1267 = vmul.f32 %v1176, %v1265
        %v1268 = vlaneseq
        %v1269 = vshrl.u32 %v1268, 7
        %v1270 = vsub.s32 1, %v1269
        %v1271 = vrot.slane %v1260, %v1270
        %v1272 = vmul.f32 %v1181, %v1271
        %v1273 = vmul.f32 %v1186, %v1271
        %v1274 = vadd.f32 %v1266, %v1272
        %v1275 = vadd.f32 %v1267, %v1273
        %v1276 = vlaneseq
        %v1277 = vshrl.u32 %v1276, 7
        %v1278 = vsub.s32 2, %v1277
        %v1279 = vrot.slane %v1260, %v1278
        %v1280 = vmul.f32 %v1191, %v1279
        %v1281 = vmul.f32 %v1196, %v1279
        %v1282 = vadd.f32 %v1274, %v1280
        %v1283 = vadd.f32 %v1275, %v1281
        %v1284 = vlaneseq
        %v1285 = vshrl.u32 %v1284, 7
        %v1286 = vsub.s32 3, %v1285
        %v1287 = vrot.slane %v1260, %v1286
        %v1288 = vmul.f32 %v1201, %v1287
        %v1289 = vmul.f32 %v1206, %v1287
        %v1290 = vadd.f32 %v1282, %v1288
        %v1291 = vadd.f32 %v1283, %v1289
        %v1292 = vlaneseq
        %v1293 = vshrl.u32 %v1292, 7
        %v1294 = vsub.s32 4, %v1293
        %v1295 = vrot.slane %v1260, %v1294
        %v1296 = vmul.f32 %v1211, %v1295
        %v1297 = vmul.f32 %v1216, %v1295
        %v1298 = vadd.f32 %v1290, %v1296
        %v1299 = vadd.f32 %v1291, %v1297
        %v1300 = vlaneseq
        %v1301 = vshrl.u32 %v1300, 7
        %v1302 = vsub.s32 5, %v1301
        %v1303 = vrot.slane %v1260, %v1302
        %v1304 = vmul.f32 %v1221, %v1303
        %v1305 = vmul.f32 %v1226, %v1303
        %v1306 = vadd.f32 %v1298, %v1304
        %v1307 = vadd.f32 %v1299, %v1305
        %v1308 = vlaneseq
        %v1309 = vshrl.u32 %v1308, 7
        %v1310 = vsub.s32 6, %v1309
        %v1311 = vrot.slane %v1260, %v1310
        %v1312 = vmul.f32 %v1231, %v1311
        %v1313 = vmul.f32 %v1236, %v1311
        %v1314 = vadd.f32 %v1306, %v1312
        %v1315 = vadd.f32 %v1307, %v1313
        %v1316 = vlaneseq
        %v1317 = vshrl.u32 %v1316, 7
        %v1318 = vsub.s32 7, %v1317
        %v1319 = vrot.slane %v1260, %v1318
        %v1320 = vmul.f32 %v1241, %v1319
        %v1321 = vmul.f32 %v1246, %v1319
        %v1322 = vadd.f32 %v1314, %v1320
        %v1323 = vadd.f32 %v1315, %v1321
        %v1324 = vlaneseq
        %v1325 = vshrl.u32 %v1324, 7
        %v1326 = vsub.s32 0, %v1325
        %v1327 = vrot.slane %v1261, %v1326
        %v1328 = vmul.f32 %v1251, %v1327
        %v1329 = vmul.f32 %v1256, %v1327
        %v1330 = vadd.f32 %v1322, %v1328
        %v1331 = vadd.f32 %v1323, %v1329
        %s1332 = scalar_lea.vmem %s8, 1
        %v1333 = vld [vmem:[%s1332] sm:$0x1]
        %s1334 = scalar_lea.vmem %s7, 1
        %v1335 = vld [vmem:[%s1334] sm:$0x1]
        %v1337 = vlaneseq
        %v1338 = vshrl.u32 %v1337, 7
        %v1339 = vsub.s32 0, %v1338
        %v1340 = vrot.slane %v1335, %v1339
        %v1342 = vadd.f32 %v1330, %v1340
        %v1343 = vadd.f32 %v1331, %v1340
        %v1344 = vmul.f32 %v1342, 0.5
        %v1345 = vmul.f32 %v1343, 0.5
        %v1346 = vmul.f32 %v1342, 0.70710677
        %v1347 = vmul.f32 %v1343, 0.70710677
        %v1348 = verf.f32.pop %v1346
        %v1349 = verf.f32.pop %v1347
        %v1350 = vadd.f32 %v1348, 1.0
        %v1351 = vadd.f32 %v1349, 1.0
        %v1352 = vmul.f32 %v1344, %v1350
        %v1353 = vmul.f32 %v1345, %v1351
        %v1355 = vlaneseq
        %v1356 = vshrl.u32 %v1355, 7
        %v1357 = vsub.s32 0, %v1356
        %v1358 = vrot.slane %v1333, %v1357
        %v1360 = vmul.f32 %v1358, %v1352
        %v1361 = vmul.f32 %v1358, %v1353
        %s1362 = scalar_lea.vmem %s9, 1
        %v1363 = vld [vmem:[%s1362] sm:$0x1]
        %v1365 = vlaneseq
        %v1366 = vshrl.u32 %v1365, 7
        %v1367 = vsub.s32 0, %v1366
        %v1368 = vrot.slane %v1363, %v1367
        %v1370 = vadd.f32 %v1360, %v1368
        %v1371 = vadd.f32 %v1361, %v1368
        %v1372 = vadd.f32 %v1370, %v1102
        %v1373 = vadd.f32 %v1371, %v1103
        %s1374 = scalar_lea.vmem %s10, 32
        %v1375 = vld [vmem:[%s1374] sm:$0xff]
        %v1376 = vld [vmem:[%s1374 + $0x8] sm:$0xff]
        %v1377 = vld [vmem:[%s1374 + $0x10] sm:$0xff]
        %v1378 = vld [vmem:[%s1374 + $0x18] sm:$0xff]
        %s1379 = scalar_lea.vmem %s12, 1
        %v1380 = vld [vmem:[%s1379] sm:$0x1]
        %s1381 = scalar_lea.vmem %s11, 1
        %v1382 = vld [vmem:[%s1381] sm:$0x1]
        %v1384 = vlaneseq
        %v1385 = vshrl.u32 %v1384, 7
        %v1386 = vsub.s32 0, %v1385
        %v1387 = vrot.slane %v1382, %v1386
        %v1390 = vsel %vm995, %v1372, 0
        %v1393 = vsel %vm995, %v1373, 0
        %1395 = vmatprep.subr.mxu0 0.0
        %1396 = vmatpush1.msra.mxu0 %v1375
        %1397 = vmatprep.subr.mxu0 0.0
        %1398 = vmatpush1.msra.mxu0 %v1376
        %1399 = vmatprep.subr.mxu0 0.0
        %1400 = vmatpush1.msra.mxu0 %v1377
        %1401 = vmatprep.subr.mxu0 0.0
        %1402 = vmatpush1.msra.mxu0 %v1378
        %1403 = vmatprep.subr.mxu0 0.0
        %1404 = vmatpush1.msra.mxu0 0.0
        %1405 = vmatprep.subr.mxu0 0.0
        %1406 = vmatpush1.msra.mxu0 0.0
        %1407 = vmatprep.subr.mxu0 0.0
        %1408 = vmatpush1.msra.mxu0 0.0
        %1409 = vmatprep.subr.mxu0 0.0
        %1410 = vmatpush1.msra.mxu0 0.0
        %1411 = vmatprep.subr.mxu0 0.0
        %1412 = vmatpush1.msra.mxu0 0.0
        %1413 = vmatprep.subr.mxu0 0.0
        %1414 = vmatpush1.msra.mxu0 0.0
        %1415 = vmatprep.subr.mxu0 0.0
        %1416 = vmatpush1.msra.mxu0 0.0
        %1417 = vmatprep.subr.mxu0 0.0
        %1418 = vmatpush1.msra.mxu0 0.0
        %1419 = vmatprep.subr.mxu0 0.0
        %1420 = vmatpush1.msra.mxu0 0.0
        %1421 = vmatprep.subr.mxu0 0.0
        %1422 = vmatpush1.msra.mxu0 0.0
        %1423 = vmatprep.subr.mxu0 0.0
        %1424 = vmatpush1.msra.mxu0 0.0
        %1425 = vmatprep.subr.mxu0 0.0
        %1426 = vmatpush1.msra.mxu0 0.0
        %1427 = vmatprep.subr.mxu0 0.0
        %1428 = vmatpush1.msra.mxu0 0.0
        %1429 = vmatprep.subr.mxu0 0.0
        %1430 = vmatpush1.msra.mxu0 0.0
        %1431 = vmatprep.subr.mxu0 0.0
        %1432 = vmatpush1.msra.mxu0 0.0
        %1433 = vmatprep.subr.mxu0 0.0
        %1434 = vmatpush1.msra.mxu0 0.0
        %1435 = vmatprep.subr.mxu0 0.0
        %1436 = vmatpush1.msra.mxu0 0.0
        %1437 = vmatprep.subr.mxu0 0.0
        %1438 = vmatpush1.msra.mxu0 0.0
        %1439 = vmatprep.subr.mxu0 0.0
        %1440 = vmatpush1.msra.mxu0 0.0
        %1441 = vmatprep.subr.mxu0 0.0
        %1442 = vmatpush1.msra.mxu0 0.0
        %1443 = vmatprep.subr.mxu0 0.0
        %1444 = vmatpush1.msra.mxu0 0.0
        %1445 = vmatprep.subr.mxu0 0.0
        %1446 = vmatpush1.msra.mxu0 0.0
        %1447 = vmatprep.subr.mxu0 0.0
        %1448 = vmatpush1.msra.mxu0 0.0
        %1449 = vmatprep.subr.mxu0 0.0
        %1450 = vmatpush1.msra.mxu0 0.0
        %1451 = vmatprep.subr.mxu0 0.0
        %1452 = vmatpush1.msra.mxu0 0.0
        %1453 = vmatprep.subr.mxu0 0.0
        %1454 = vmatpush1.msra.mxu0 0.0
        %1455 = vmatprep.subr.mxu0 0.0
        %1456 = vmatpush1.msra.mxu0 0.0
        %1457 = vmatprep.subr.mxu0 0.0
        %1458 = vmatpush1.msra.mxu0 0.0
        %1459 = vmatprep.mubr.f32.mxu0 0.0
        %1460 = vmatmul.mubr.f32.gmra.mrb[0].mxu0 %v1390
        %v1461 = vpop.f32.mrb[0].mxu0
        %v1462 = vadd.f32 %v1387, %v1461
        %v1463 = vpop.f32.mrb[0].mxu0
        %1464 = vmatprep.mubr.f32.mxu0 0.0
        %1465 = vmatmul.mubr.f32.gmra.mrb[0].mxu0 %v1393
        %v1466 = vpop.f32.mrb[0].mxu0
        %v1467 = vadd.f32 %v1387, %v1466
        %v1468 = vpop.f32.mrb[0].mxu0
        %1469 = vdwg.mxu0
        %v1470 = vmul.f32 %v1462, 0.5
        %v1471 = vmul.f32 %v1467, 0.5
        %v1472 = vmul.f32 %v1462, 0.70710677
        %v1473 = vmul.f32 %v1467, 0.70710677
        %v1474 = verf.f32.pop %v1472
        %v1475 = verf.f32.pop %v1473
        %v1476 = vadd.f32 %v1474, 1.0
        %v1477 = vadd.f32 %v1475, 1.0
        %v1478 = vmul.f32 %v1470, %v1476
        %v1479 = vmul.f32 %v1471, %v1477
        %v1481 = vlaneseq
        %v1482 = vshrl.u32 %v1481, 7
        %v1483 = vsub.s32 0, %v1482
        %v1484 = vrot.slane %v1380, %v1483
        %v1486 = vmul.f32 %v1484, %v1478
        %v1487 = vmul.f32 %v1484, %v1479
        %s1488 = scalar_lea.vmem %s13, 1
        %v1489 = vld [vmem:[%s1488] sm:$0x1]
        %v1491 = vlaneseq
        %v1492 = vshrl.u32 %v1491, 7
        %v1493 = vsub.s32 0, %v1492
        %v1494 = vrot.slane %v1489, %v1493
        %v1496 = vadd.f32 %v1486, %v1494
        %v1497 = vadd.f32 %v1487, %v1494
        %v1498 = vld [vmem:[%s14] sm:$0xff]
        %v1499 = vld [vmem:[%s14 + $0x8] sm:$0xff]
        %v1500 = vld [vmem:[%s14 + $0x10] sm:$0xff]
        %v1501 = vld [vmem:[%s14 + $0x18] sm:$0xff]
        %v1503 = vsel %vm995, %v1496, 0
        %v1506 = vsel %vm995, %v1497, 0
        %1508 = vmatprep.subr.mxu0 0.0
        %1509 = vmatpush1.msra.mxu0 %v1498
        %1510 = vmatprep.subr.mxu0 0.0
        %1511 = vmatpush1.msra.mxu0 %v1499
        %1512 = vmatprep.subr.mxu0 0.0
        %1513 = vmatpush1.msra.mxu0 %v1500
        %1514 = vmatprep.subr.mxu0 0.0
        %1515 = vmatpush1.msra.mxu0 %v1501
        %1516 = vmatprep.subr.mxu0 0.0
        %1517 = vmatpush1.msra.mxu0 0.0
        %1518 = vmatprep.subr.mxu0 0.0
        %1519 = vmatpush1.msra.mxu0 0.0
        %1520 = vmatprep.subr.mxu0 0.0
        %1521 = vmatpush1.msra.mxu0 0.0
        %1522 = vmatprep.subr.mxu0 0.0
        %1523 = vmatpush1.msra.mxu0 0.0
        %1524 = vmatprep.subr.mxu0 0.0
        %1525 = vmatpush1.msra.mxu0 0.0
        %1526 = vmatprep.subr.mxu0 0.0
        %1527 = vmatpush1.msra.mxu0 0.0
        %1528 = vmatprep.subr.mxu0 0.0
        %1529 = vmatpush1.msra.mxu0 0.0
        %1530 = vmatprep.subr.mxu0 0.0
        %1531 = vmatpush1.msra.mxu0 0.0
        %1532 = vmatprep.subr.mxu0 0.0
        %1533 = vmatpush1.msra.mxu0 0.0
        %1534 = vmatprep.subr.mxu0 0.0
        %1535 = vmatpush1.msra.mxu0 0.0
        %1536 = vmatprep.subr.mxu0 0.0
        %1537 = vmatpush1.msra.mxu0 0.0
        %1538 = vmatprep.subr.mxu0 0.0
        %1539 = vmatpush1.msra.mxu0 0.0
        %1540 = vmatprep.subr.mxu0 0.0
        %1541 = vmatpush1.msra.mxu0 0.0
        %1542 = vmatprep.subr.mxu0 0.0
        %1543 = vmatpush1.msra.mxu0 0.0
        %1544 = vmatprep.subr.mxu0 0.0
        %1545 = vmatpush1.msra.mxu0 0.0
        %1546 = vmatprep.subr.mxu0 0.0
        %1547 = vmatpush1.msra.mxu0 0.0
        %1548 = vmatprep.subr.mxu0 0.0
        %1549 = vmatpush1.msra.mxu0 0.0
        %1550 = vmatprep.subr.mxu0 0.0
        %1551 = vmatpush1.msra.mxu0 0.0
        %1552 = vmatprep.subr.mxu0 0.0
        %1553 = vmatpush1.msra.mxu0 0.0
        %1554 = vmatprep.subr.mxu0 0.0
        %1555 = vmatpush1.msra.mxu0 0.0
        %1556 = vmatprep.subr.mxu0 0.0
        %1557 = vmatpush1.msra.mxu0 0.0
        %1558 = vmatprep.subr.mxu0 0.0
        %1559 = vmatpush1.msra.mxu0 0.0
        %1560 = vmatprep.subr.mxu0 0.0
        %1561 = vmatpush1.msra.mxu0 0.0
        %1562 = vmatprep.subr.mxu0 0.0
        %1563 = vmatpush1.msra.mxu0 0.0
        %1564 = vmatprep.subr.mxu0 0.0
        %1565 = vmatpush1.msra.mxu0 0.0
        %1566 = vmatprep.subr.mxu0 0.0
        %1567 = vmatpush1.msra.mxu0 0.0
        %1568 = vmatprep.subr.mxu0 0.0
        %1569 = vmatpush1.msra.mxu0 0.0
        %1570 = vmatprep.subr.mxu0 0.0
        %1571 = vmatpush1.msra.mxu0 0.0
        %1572 = vmatprep.mubr.f32.mxu0 0.0
        %1573 = vmatmul.mubr.f32.gmra.mrb[0].mxu0 %v1503
        %v1574 = vpop.f32.mrb[0].mxu0
        %v1575 = vadd.f32 0.0, %v1574
        %v1576 = vpop.f32.mrb[0].mxu0
        %1577 = vmatprep.mubr.f32.mxu0 0.0
        %1578 = vmatmul.mubr.f32.gmra.mrb[0].mxu0 %v1506
        %v1579 = vpop.f32.mrb[0].mxu0
        %v1580 = vadd.f32 0.0, %v1579
        %v1581 = vpop.f32.mrb[0].mxu0
        %1582 = vdwg.mxu0
        %v1583 = vadd.f32 %v1575, %v1580
        %v1584 = vrot.slane %v1583, 4
        %v1585 = vadd.f32 %v1583, %v1584
        %v1586 = vrot.slane %v1585, 2
        %v1587 = vadd.f32 %v1585, %v1586
        %v1588 = vrot.slane %v1587, 1
        %v1589 = vadd.f32 %v1587, %v1588
        %v1590 = vrcp.pop 16.0
        %v1591 = vmul.f32 %v1589, %v1590
        %v1592 = vld [vmem:[%s15] sm:$0x1]
        %v1593 = vadd.f32 %v1591, %v1592
        %1594 = vst [vmem:[%s513] sm:$0x1] %v1593
        %s1595 = sand.u32 %s379, 1
        %s1596 = scalar_lea.sflag [#allocation3], %s1595
        %s1597 = sand.u32 %s379, 1
        %s1598 = scalar_lea.vmem [#allocation2], %s1597
        // Predicated region
        $region85: #{convmixer_forward.1} parent=83 // pred_check
          %p1599 = pneg %p389
        $region86: #{convmixer_forward.1} parent=83 // pred_check_branch
          %1601 = sbr.rel (%p1599) target = $region88
        $region87: #{convmixer_forward.1} parent=83 // pred_region
          %s1603 = ssub.s32 16, 16
          %1604 = vsyncadd %s1596, %s1603
          %s1605 = smul.addr %s30, 16
          %s1606 = scalar_lea.hbm %s16, %s1605
          %s1608 = sshll.u32 %s1598, 4
          %s1609 = int_to_ptr.vmem [resolvable:$true] %s1608
          %1611 = dma.vmem_to_hbm [thread:$0]  %s1609, 16, %s1606, %s1596
        $region88: #{convmixer_forward.1} parent=83 // pred_fallthru
          _
      $region84: #{convmixer_forward.1} parent=5 // pred_fallthru
        _
      %p1612 = scmp.le.s32.totalorder 2, %s25
      // Predicated region
      $region89: #{convmixer_forward.1} parent=5 // pred_check
        %p1613 = pneg %p1612
      $region90: #{convmixer_forward.1} parent=5 // pred_check_branch
        %1615 = sbr.rel (%p1613) target = $region92
      $region91: #{convmixer_forward.1} parent=5 // pred_region
        %s1616 = ssub.s32 %s25, 2
        // Predicated region
        $region93: #{convmixer_forward.1} parent=91 // pred_check
          %p1617 = pneg %p395
        $region94: #{convmixer_forward.1} parent=91 // pred_check_branch
          %1619 = sbr.rel (%p1617) target = $region96
        $region95: #{convmixer_forward.1} parent=91 // pred_region
          %s1620 = sand.u32 %s380, 1
          %s1621 = scalar_lea.sflag [#allocation3], %s1620
          %s1622 = sand.u32 %s380, 1
          %s1623 = scalar_lea.vmem [#allocation2], %s1622
          %1624 = dma.done %s1621, 16
        $region96: #{convmixer_forward.1} parent=91 // pred_fallthru
          _
      $region92: #{convmixer_forward.1} parent=5 // pred_fallthru
        _
    $region6: #{convmixer_forward.1} parent=1 // loop_footer
      %s29 = sadd.s32 1, %s25
    $region7: #{convmixer_forward.1} parent=1 // loop_footer_branch
      %24 = sbr.rel target = $region3
    $region8: #{convmixer_forward.1} parent=1 // loop_exit
      _
    %1625 = vsyncpa [#allocation3], 1
    %s1626 = scalar_lea.sflag [#allocation3], 1
    %1627 = vsyncpa %s1626, 1

</llo_original>
